<compile_context>
chip_gen: v5e
topology: v5e:2x2
jax: 0.10.0
libtpu: 0.0.40
codegen_flags: <defaults>
</compile_context>

<pallas_src>
import functools

import jax
import jax.numpy as jnp
from jax.experimental import pallas as pl
from jax.experimental.pallas import tpu as pltpu


def _silu(v):
    return v * jax.nn.sigmoid(v)


def _output_pp_kernel(num_heads, num_layers, oe, ocp, tile_e, y_resident,
                      y_ref, idx_ref,
                      w_up_ref, w_lay_ref, b_lay_ref, w_out_ref,
                      *rest):
    out_refs = rest[:num_heads]
    acc_ref = rest[num_heads]

    e = pl.program_id(1)
    tile_n = acc_ref.shape[0]

    @pl.when(e == 0)
    def _():
        acc_ref[...] = jnp.zeros_like(acc_ref)

    # Per-edge activations (bf16). Resident mode: slice the VMEM-resident slab;
    # streaming mode: the BlockSpec already delivered this tile.
    if y_resident:
        e0 = pl.multiple_of(e * tile_e, tile_e)
        y = y_ref[pl.ds(e0, tile_e), :]                       # (tE, H) bf16
    else:
        y = y_ref[...]                                        # (tE, H) bf16

    # Tiled scatter-sum as a one-hot matmul. The iota is grid-invariant; only
    # the (1, tile_e) index row is shifted per node tile (cheap VALU).
    n0 = pl.program_id(0) * tile_n
    local_idx = idx_ref[...] - n0                             # (1, tE) int32
    row_ids = jax.lax.broadcasted_iota(jnp.int32, (tile_n, tile_e), 0)
    onehot = (row_ids == local_idx).astype(jnp.bfloat16)      # (tN, tE)
    acc_ref[...] += jnp.dot(onehot, y, preferred_element_type=jnp.float32)

    # Head MLPs run once per node tile, after the last edge tile (f32 for
    # accuracy; these are small weight-resident matmuls).
    @pl.when(e == pl.num_programs(1) - 1)
    def _():
        node_x = acc_ref[...]                                 # (tN, H) f32
        # Single wide up-projection for all heads: (tN, H) @ (H, A*OE).
        up = jnp.dot(node_x, w_up_ref[...],
                     preferred_element_type=jnp.float32)
        hs = []
        for a in range(num_heads):
            h = up[:, a * oe:(a + 1) * oe]
            for l in range(num_layers):
                h = _silu(jnp.dot(h, w_lay_ref[a, l],
                                  preferred_element_type=jnp.float32)
                          + b_lay_ref[a, l])
            hs.append(h)
        # Single wide output projection via a block-diagonal weight:
        # (tN, A*OE) @ (A*OE, A*OCp) — correct per-head math, one MXU issue.
        h_cat = jnp.concatenate(hs, axis=-1)
        out_cat = jnp.dot(h_cat, w_out_ref[...],
                          preferred_element_type=jnp.float32)
        for a in range(num_heads):
            out_refs[a][...] = out_cat[:, a * ocp:(a + 1) * ocp].astype(
                out_refs[a].dtype)


def output_pp_block_suf(params, x, rbf, i, num_nodes, *, num_aux, num_layers,
                        bt=None, alpha=1.0, lambda_d=None,
                        tile_e=512, tile_n=256):
    """Pallas-TPU forward of OutputPPBlockSUF; returns a list of head outputs."""
    del bt, alpha, lambda_d  # accepted by the PyTorch forward but never used

    E, H = x.shape
    A = num_aux + 1
    OE = params["w_up"].shape[-1]
    OC = params["w_out"].shape[-1]

    # --- wrapper-side precompute -------------------------------------------
    # y = (rbf @ W_rbf) * x, once, in f32; cast to bf16 for the scatter matmul.
    y = (rbf.astype(jnp.float32) @ params["w_rbf"].astype(jnp.float32)) \
        * x.astype(jnp.float32)

    # Lane-dense output: zero-pad out_channels up to a multiple of 128.
    OCp = ((OC + 127) // 128) * 128
    w_out = params["w_out"].astype(jnp.float32)
    if OCp != OC:
        w_out = jnp.pad(w_out, ((0, 0), (0, 0), (0, OCp - OC)))

    # All-heads wide up-projection weight (H, A*OE) and block-diagonal output
    # projection weight (A*OE, A*OCp).
    w_up_cat = jnp.concatenate(
        [params["w_up"][a].astype(jnp.float32) for a in range(A)], axis=-1)
    w_out_bd = jnp.zeros((A * OE, A * OCp), jnp.float32)
    for a in range(A):
        w_out_bd = w_out_bd.at[a * OE:(a + 1) * OE,
                               a * OCp:(a + 1) * OCp].set(w_out[a])

    # Clamp tiles for tiny problems (layout-aligned), keep user sizes otherwise.
    # For v7x, pick tile_n so num_n_tiles >= 2 when the node count allows it,
    # so the "parallel" axis shards across both TensorCores.
    tile_n = max(8, min(int(tile_n), pl.cdiv(num_nodes, 8) * 8))
    tile_e = max(128, min(int(tile_e), pl.cdiv(E, 128) * 128))

    # Pad edges/nodes to tile multiples; padded edges get node id == N_pad,
    # which never matches a real node row, so they contribute nothing.
    E_pad = pl.cdiv(E, tile_e) * tile_e
    N_pad = pl.cdiv(num_nodes, tile_n) * tile_n
    y_p = jnp.pad(y, ((0, E_pad - E), (0, 0))).astype(jnp.bfloat16)
    idx_p = jnp.pad(i.astype(jnp.int32), (0, E_pad - E),
                    constant_values=N_pad).reshape(1, E_pad)

    num_n_tiles = N_pad // tile_n
    num_e_tiles = E_pad // tile_e

    # Residency decision: keep bf16 y fully VMEM-resident when it is small
    # enough to be safe on every generation (v7x has only 64 MiB physical).
    y_bytes = E_pad * H * 2
    y_resident = y_bytes <= 32 * 1024 * 1024
    if y_resident:
        y_spec = pl.BlockSpec((E_pad, H), lambda n, e: (0, 0))
        vmem_limit = int(min(56 * 1024 * 1024, y_bytes + 24 * 1024 * 1024))
    else:
        # Streaming: deeper pipeline hides the thin flops-per-byte DMA.
        y_spec = pl.BlockSpec((tile_e, H), lambda n, e: (e, 0),
                              pipeline_mode=pl.Buffered(3))
        vmem_limit = 48 * 1024 * 1024

    in_specs = [
        y_spec,                                                   # y (bf16)
        pl.BlockSpec((1, tile_e), lambda n, e: (0, e)),           # idx (lane-dense)
        pl.BlockSpec((H, A * OE), lambda n, e: (0, 0)),           # W_up (wide)
        pl.BlockSpec((A, num_layers, OE, OE), lambda n, e: (0, 0, 0, 0)),
        pl.BlockSpec((A, num_layers, 1, OE), lambda n, e: (0, 0, 0, 0)),
        pl.BlockSpec((A * OE, A * OCp), lambda n, e: (0, 0)),     # W_out (blockdiag)
    ]
    out_specs = tuple(
        pl.BlockSpec((tile_n, OCp), lambda n, e: (n, 0)) for _ in range(A))
    out_shape = tuple(
        jax.ShapeDtypeStruct((N_pad, OCp), jnp.float32) for _ in range(A))

    flops = int(
        2 * N_pad * E_pad * H                                  # one-hot scatter
        + 2 * N_pad * H * (A * OE)                             # wide up-proj
        + A * num_layers * (2 * N_pad * OE * OE + 4 * N_pad * OE)
        + 2 * N_pad * (A * OE) * (A * OCp))                    # blockdiag out-proj
    transcendentals = int(A * num_layers * N_pad * OE)
    bytes_accessed = int(
        y_bytes * (1 if y_resident else num_n_tiles)
        + num_n_tiles * E_pad * 4
        + 4 * (H * A * OE + A * num_layers * (OE * OE + OE) + A * OE * A * OCp)
        + A * N_pad * OCp * 4)

    kernel = functools.partial(_output_pp_kernel, A, num_layers, OE, OCp,
                               tile_e, y_resident)

    outs = pl.pallas_call(
        kernel,
        out_shape=out_shape,
        grid_spec=pltpu.PrefetchScalarGridSpec(
            num_scalar_prefetch=0,
            grid=(num_n_tiles, num_e_tiles),
            in_specs=in_specs,
            out_specs=out_specs,
            scratch_shapes=[pltpu.VMEM((tile_n, H), jnp.float32)],
        ),
        compiler_params=pltpu.CompilerParams(
            dimension_semantics=("parallel", "arbitrary"),
            vmem_limit_bytes=vmem_limit,
        ),
        cost_estimate=pl.CostEstimate(
            flops=flops, transcendentals=transcendentals,
            bytes_accessed=bytes_accessed),
    )(y_p, idx_p, w_up_cat,
      params["w_lay"].astype(jnp.float32),
      params["b_lay"].astype(jnp.float32),
      w_out_bd)

    return [o[:num_nodes, :OC] for o in outs]


def reference_forward(params, x, rbf, i, num_nodes, num_aux, num_layers):
    """Plain-JAX (f32) reference of the PyTorch forward semantics."""
    act = jax.nn.silu
    y = (rbf @ params["w_rbf"]) * x
    nx = jnp.zeros((num_nodes, y.shape[1]), jnp.float32).at[i].add(y)
    outs = []
    for a in range(num_aux + 1):
        h = nx @ params["w_up"][a]
        for l in range(num_layers):
            h = act(h @ params["w_lay"][a, l] + params["b_lay"][a, l])
        outs.append(h @ params["w_out"][a])
    return outs


def init_params(key, num_radial, hidden, out_emb, out_channels, num_layers,
                num_aux):
    """Deterministic synthetic init; weights stored as (in_features, out_features)."""
    A = num_aux + 1
    keys = iter(jax.random.split(key, 8))

    def w(shape):
        fan_in = shape[-2]
        return (jax.random.normal(next(keys), shape, jnp.float32)
                / jnp.sqrt(jnp.float32(fan_in)))

    return dict(
        w_rbf=w((num_radial, hidden)),
        w_up=w((A, hidden, out_emb)),
        w_lay=w((A, num_layers, out_emb, out_emb)),
        b_lay=0.1 * jax.random.normal(next(keys), (A, num_layers, 1, out_emb),
                                      jnp.float32),
        w_out=w((A, out_emb, out_channels)),
    )


if __name__ == "__main__":
    # Small config consistent with the module's __init__ (H/OE lane-dense).
    num_radial = 6
    hidden_channels = 128
    out_emb_channels = 128
    out_channels = 8
    num_layers = 3
    num_aux = 1
    E = 200   # directed edges (rows of x / rbf / i)
    N = 50    # nodes (num_nodes)

    key = jax.random.PRNGKey(0)
    kp, kx, kr, ki = jax.random.split(key, 4)

    params = init_params(kp, num_radial, hidden_channels, out_emb_channels,
                         out_channels, num_layers, num_aux)

    x = jax.random.normal(kx, (E, hidden_channels), jnp.float32)
    rbf = jax.random.normal(kr, (E, num_radial), jnp.float32)
    idx = jax.random.randint(ki, (E,), 0, N, jnp.int32)

    outs = output_pp_block_suf(params, x, rbf, idx, N,
                               num_aux=num_aux, num_layers=num_layers)
    outs = jax.block_until_ready(outs)

    refs = reference_forward(params, x, rbf, idx, N, num_aux, num_layers)
    refs = jax.block_until_ready(refs)

    assert len(outs) == num_aux + 1
    for o, r in zip(outs, refs):
        assert o.shape == r.shape == (N, out_channels)
        err = float(jnp.max(jnp.abs(o - r)))
        scale = float(jnp.max(jnp.abs(r))) + 1e-6
        # The scatter matmul uses bf16 operands (f32 accumulation); everything
        # else is f32, so a small relative tolerance is appropriate.
        assert err <= 2e-2 * scale + 5e-3, \
            f"kernel vs reference mismatch: {err} (scale {scale})"
    print("KERNEL_OK")
</pallas_src>

<mosaic_0001>
module attributes {stable_mosaic.version = 11 : i64} {
  func.func @_output_pp_kernel(%arg0: i32, %arg1: i32, %arg2: memref<256x128xbf16, #tpu.memory_space<vmem>>, %arg3: memref<1x256xi32, #tpu.memory_space<vmem>>, %arg4: memref<128x256xf32, #tpu.memory_space<vmem>>, %arg5: memref<2x3x128x128xf32, #tpu.memory_space<vmem>>, %arg6: memref<2x3x1x128xf32, #tpu.memory_space<vmem>>, %arg7: memref<256x256xf32, #tpu.memory_space<vmem>>, %arg8: memref<56x128xf32, #tpu.memory_space<vmem>>, %arg9: memref<56x128xf32, #tpu.memory_space<vmem>>, %arg10: memref<56x128xf32, #tpu.memory_space<vmem>>) attributes {dimension_semantics = [#tpu.dimension_semantics<parallel>, #tpu.dimension_semantics<arbitrary>], iteration_bounds = array<i64: 1, 1>, scalar_prefetch = 0 : i64, scratch_operands = 1 : i64, tpu.core_type = #tpu.core_type<tc>, window_params = [{pipeline_mode = #tpu.pipeline_mode<synchronous>, transform_indices = @transform_0, window_bounds = array<i64: 256, 128>}, {transform_indices = @transform_1, window_bounds = array<i64: 1, 256>}, {pipeline_mode = #tpu.pipeline_mode<synchronous>, transform_indices = @transform_2, window_bounds = array<i64: 128, 256>}, {pipeline_mode = #tpu.pipeline_mode<synchronous>, transform_indices = @transform_3, window_bounds = array<i64: 2, 3, 128, 128>}, {pipeline_mode = #tpu.pipeline_mode<synchronous>, transform_indices = @transform_4, window_bounds = array<i64: 2, 3, 1, 128>}, {pipeline_mode = #tpu.pipeline_mode<synchronous>, transform_indices = @transform_5, window_bounds = array<i64: 256, 256>}, {transform_indices = @transform_6, window_bounds = array<i64: 56, 128>}, {transform_indices = @transform_7, window_bounds = array<i64: 56, 128>}]} {
    %c0_i32 = arith.constant 0 : i32
    %0 = arith.cmpi eq, %arg1, %c0_i32 : i32
    %1 = arith.extui %0 : i1 to i32
    %c0_i32_0 = arith.constant 0 : i32
    %2 = arith.cmpi ne, %1, %c0_i32_0 : i32
    scf.if %2 {
      %cst_9 = arith.constant 0.000000e+00 : f32
      %24 = vector.broadcast %cst_9 : f32 to vector<56x128xf32>
      %c0_10 = arith.constant 0 : index
      %c0_11 = arith.constant 0 : index
      %25 = vector.load %arg10[%c0_10, %c0_11] : memref<56x128xf32, #tpu.memory_space<vmem>>, vector<56x128xf32>
      tpu.vector_store %arg10[%c0_10, %c0_11], %24 {strides = array<i32>} : memref<56x128xf32, #tpu.memory_space<vmem>>, vector<56x128xf32>,
    } else {
    }
    %c256_i32 = arith.constant 256 : i32
    %3 = arith.muli %arg1, %c256_i32 : i32
    %4 = tpu.assume_multiple %3, 256 : i32
    %5 = arith.index_cast %4 : i32 to index
    %c0 = arith.constant 0 : index
    %6 = vector.load %arg2[%5, %c0] : memref<256x128xbf16, #tpu.memory_space<vmem>>, vector<256x128xbf16>
    %c56_i32 = arith.constant 56 : i32
    %7 = arith.muli %arg0, %c56_i32 : i32
    %c0_1 = arith.constant 0 : index
    %c0_2 = arith.constant 0 : index
    %8 = vector.load %arg3[%c0_1, %c0_2] : memref<1x256xi32, #tpu.memory_space<vmem>>, vector<1x256xi32>
    %9 = vector.broadcast %7 : i32 to vector<1x256xi32>
    %10 = arith.subi %8, %9 : vector<1x256xi32>
    %11 = tpu.iota {dimensions = array<i32: 0>} : vector<56x256xi32>
    %12 = vector.broadcast %10 : vector<1x256xi32> to vector<56x256xi32>
    %13 = arith.cmpi eq, %11, %12 : vector<56x256xi32>
    %14 = arith.extui %13 : vector<56x256xi1> to vector<56x256xi32>
    %15 = arith.sitofp %14 : vector<56x256xi32> to vector<56x256xf32>
    %16 = arith.truncf %15 : vector<56x256xf32> to vector<56x256xbf16>
    %c0_3 = arith.constant 0 : index
    %c0_4 = arith.constant 0 : index
    %17 = vector.load %arg10[%c0_3, %c0_4] : memref<56x128xf32, #tpu.memory_space<vmem>>, vector<56x128xf32>
    %cst = arith.constant dense<0.000000e+00> : vector<56x128xf32>
    %18 = tpu.matmul %16, %6, %cst {dimension_numbers = #tpu.dot_dimension_numbers<[1], [0], [0], [1], [0, 0, 1, 1], [], []>} : vector<56x256xbf16>, vector<256x128xbf16>, vector<56x128xf32> -> vector<56x128xf32>
    %19 = arith.addf %17, %18 : vector<56x128xf32>
    %c0_5 = arith.constant 0 : index
    %c0_6 = arith.constant 0 : index
    %20 = vector.load %arg10[%c0_5, %c0_6] : memref<56x128xf32, #tpu.memory_space<vmem>>, vector<56x128xf32>
    tpu.vector_store %arg10[%c0_5, %c0_6], %19 {strides = array<i32>} : memref<56x128xf32, #tpu.memory_space<vmem>>, vector<56x128xf32>,
    %c0_i32_7 = arith.constant 0 : i32
    %21 = arith.cmpi eq, %arg1, %c0_i32_7 : i32
    %22 = arith.extui %21 : i1 to i32
    %c0_i32_8 = arith.constant 0 : i32
    %23 = arith.cmpi ne, %22, %c0_i32_8 : i32
    scf.if %23 {
      %c0_9 = arith.constant 0 : index
      %c0_10 = arith.constant 0 : index
      %24 = vector.load %arg10[%c0_9, %c0_10] : memref<56x128xf32, #tpu.memory_space<vmem>>, vector<56x128xf32>
      %c0_11 = arith.constant 0 : index
      %c0_12 = arith.constant 0 : index
      %25 = vector.load %arg4[%c0_11, %c0_12] : memref<128x256xf32, #tpu.memory_space<vmem>>, vector<128x256xf32>
      %cst_13 = arith.constant dense<0.000000e+00> : vector<56x256xf32>
      %26 = tpu.matmul %24, %25, %cst_13 {dimension_numbers = #tpu.dot_dimension_numbers<[1], [0], [0], [1], [0, 0, 1, 1], [], []>} : vector<56x128xf32>, vector<128x256xf32>, vector<56x256xf32> -> vector<56x256xf32>
      %27 = vector.extract_strided_slice %26 {offsets = [0, 0], sizes = [56, 128], strides = [1, 1]} : vector<56x256xf32> to vector<56x128xf32>
      %c0_14 = arith.constant 0 : index
      %c0_15 = arith.constant 0 : index
      %c0_16 = arith.constant 0 : index
      %c0_17 = arith.constant 0 : index
      %28 = vector.load %arg5[%c0_14, %c0_15, %c0_16, %c0_17] : memref<2x3x128x128xf32, #tpu.memory_space<vmem>>, vector<1x1x128x128xf32>
      %29 = vector.shape_cast %28 : vector<1x1x128x128xf32> to vector<128x128xf32>
      %cst_18 = arith.constant dense<0.000000e+00> : vector<56x128xf32>
      %30 = tpu.matmul %27, %29, %cst_18 {dimension_numbers = #tpu.dot_dimension_numbers<[1], [0], [0], [1], [0, 0, 1, 1], [], []>} : vector<56x128xf32>, vector<128x128xf32>, vector<56x128xf32> -> vector<56x128xf32>
      %c0_19 = arith.constant 0 : index
      %c0_20 = arith.constant 0 : index
      %c0_21 = arith.constant 0 : index
      %c0_22 = arith.constant 0 : index
      %31 = vector.load %arg6[%c0_19, %c0_20, %c0_21, %c0_22] : memref<2x3x1x128xf32, #tpu.memory_space<vmem>>, vector<1x1x1x128xf32>
      %32 = vector.shape_cast %31 : vector<1x1x1x128xf32> to vector<1x128xf32>
      %33 = vector.broadcast %32 : vector<1x128xf32> to vector<56x128xf32>
      %34 = arith.addf %30, %33 : vector<56x128xf32>
      %35 = arith.negf %34 : vector<56x128xf32>
      %36 = math.exp %35 : vector<56x128xf32>
      %cst_23 = arith.constant 1.000000e+00 : f32
      %37 = vector.broadcast %cst_23 : f32 to vector<56x128xf32>
      %38 = arith.addf %37, %36 : vector<56x128xf32>
      %39 = arith.divf %37, %38 : vector<56x128xf32>
      %40 = arith.mulf %34, %39 : vector<56x128xf32>
      %c0_24 = arith.constant 0 : index
      %c1 = arith.constant 1 : index
      %c0_25 = arith.constant 0 : index
      %c0_26 = arith.constant 0 : index
      %41 = vector.load %arg5[%c0_24, %c1, %c0_25, %c0_26] : memref<2x3x128x128xf32, #tpu.memory_space<vmem>>, vector<1x1x128x128xf32>
      %42 = vector.shape_cast %41 : vector<1x1x128x128xf32> to vector<128x128xf32>
      %cst_27 = arith.constant dense<0.000000e+00> : vector<56x128xf32>
      %43 = tpu.matmul %40, %42, %cst_27 {dimension_numbers = #tpu.dot_dimension_numbers<[1], [0], [0], [1], [0, 0, 1, 1], [], []>} : vector<56x128xf32>, vector<128x128xf32>, vector<56x128xf32> -> vector<56x128xf32>
      %c0_28 = arith.constant 0 : index
      %c1_29 = arith.constant 1 : index
      %c0_30 = arith.constant 0 : index
      %c0_31 = arith.constant 0 : index
      %44 = vector.load %arg6[%c0_28, %c1_29, %c0_30, %c0_31] : memref<2x3x1x128xf32, #tpu.memory_space<vmem>>, vector<1x1x1x128xf32>
      %45 = vector.shape_cast %44 : vector<1x1x1x128xf32> to vector<1x128xf32>
      %46 = vector.broadcast %45 : vector<1x128xf32> to vector<56x128xf32>
      %47 = arith.addf %43, %46 : vector<56x128xf32>
      %48 = arith.negf %47 : vector<56x128xf32>
      %49 = math.exp %48 : vector<56x128xf32>
      %cst_32 = arith.constant 1.000000e+00 : f32
      %50 = vector.broadcast %cst_32 : f32 to vector<56x128xf32>
      %51 = arith.addf %50, %49 : vector<56x128xf32>
      %52 = arith.divf %50, %51 : vector<56x128xf32>
      %53 = arith.mulf %47, %52 : vector<56x128xf32>
      %c0_33 = arith.constant 0 : index
      %c2 = arith.constant 2 : index
      %c0_34 = arith.constant 0 : index
      %c0_35 = arith.constant 0 : index
      %54 = vector.load %arg5[%c0_33, %c2, %c0_34, %c0_35] : memref<2x3x128x128xf32, #tpu.memory_space<vmem>>, vector<1x1x128x128xf32>
      %55 = vector.shape_cast %54 : vector<1x1x128x128xf32> to vector<128x128xf32>
      %cst_36 = arith.constant dense<0.000000e+00> : vector<56x128xf32>
      %56 = tpu.matmul %53, %55, %cst_36 {dimension_numbers = #tpu.dot_dimension_numbers<[1], [0], [0], [1], [0, 0, 1, 1], [], []>} : vector<56x128xf32>, vector<128x128xf32>, vector<56x128xf32> -> vector<56x128xf32>
      %c0_37 = arith.constant 0 : index
      %c2_38 = arith.constant 2 : index
      %c0_39 = arith.constant 0 : index
      %c0_40 = arith.constant 0 : index
      %57 = vector.load %arg6[%c0_37, %c2_38, %c0_39, %c0_40] : memref<2x3x1x128xf32, #tpu.memory_space<vmem>>, vector<1x1x1x128xf32>
      %58 = vector.shape_cast %57 : vector<1x1x1x128xf32> to vector<1x128xf32>
      %59 = vector.broadcast %58 : vector<1x128xf32> to vector<56x128xf32>
      %60 = arith.addf %56, %59 : vector<56x128xf32>
      %61 = arith.negf %60 : vector<56x128xf32>
      %62 = math.exp %61 : vector<56x128xf32>
      %cst_41 = arith.constant 1.000000e+00 : f32
      %63 = vector.broadcast %cst_41 : f32 to vector<56x128xf32>
      %64 = arith.addf %63, %62 : vector<56x128xf32>
      %65 = arith.divf %63, %64 : vector<56x128xf32>
      %66 = arith.mulf %60, %65 : vector<56x128xf32>
      %67 = vector.extract_strided_slice %26 {offsets = [0, 128], sizes = [56, 128], strides = [1, 1]} : vector<56x256xf32> to vector<56x128xf32>
      %c1_42 = arith.constant 1 : index
      %c0_43 = arith.constant 0 : index
      %c0_44 = arith.constant 0 : index
      %c0_45 = arith.constant 0 : index
      %68 = vector.load %arg5[%c1_42, %c0_43, %c0_44, %c0_45] : memref<2x3x128x128xf32, #tpu.memory_space<vmem>>, vector<1x1x128x128xf32>
      %69 = vector.shape_cast %68 : vector<1x1x128x128xf32> to vector<128x128xf32>
      %cst_46 = arith.constant dense<0.000000e+00> : vector<56x128xf32>
      %70 = tpu.matmul %67, %69, %cst_46 {dimension_numbers = #tpu.dot_dimension_numbers<[1], [0], [0], [1], [0, 0, 1, 1], [], []>} : vector<56x128xf32>, vector<128x128xf32>, vector<56x128xf32> -> vector<56x128xf32>
      %c1_47 = arith.constant 1 : index
      %c0_48 = arith.constant 0 : index
      %c0_49 = arith.constant 0 : index
      %c0_50 = arith.constant 0 : index
      %71 = vector.load %arg6[%c1_47, %c0_48, %c0_49, %c0_50] : memref<2x3x1x128xf32, #tpu.memory_space<vmem>>, vector<1x1x1x128xf32>
      %72 = vector.shape_cast %71 : vector<1x1x1x128xf32> to vector<1x128xf32>
      %73 = vector.broadcast %72 : vector<1x128xf32> to vector<56x128xf32>
      %74 = arith.addf %70, %73 : vector<56x128xf32>
      %75 = arith.negf %74 : vector<56x128xf32>
      %76 = math.exp %75 : vector<56x128xf32>
      %cst_51 = arith.constant 1.000000e+00 : f32
      %77 = vector.broadcast %cst_51 : f32 to vector<56x128xf32>
      %78 = arith.addf %77, %76 : vector<56x128xf32>
      %79 = arith.divf %77, %78 : vector<56x128xf32>
      %80 = arith.mulf %74, %79 : vector<56x128xf32>
      %c1_52 = arith.constant 1 : index
      %c1_53 = arith.constant 1 : index
      %c0_54 = arith.constant 0 : index
      %c0_55 = arith.constant 0 : index
      %81 = vector.load %arg5[%c1_52, %c1_53, %c0_54, %c0_55] : memref<2x3x128x128xf32, #tpu.memory_space<vmem>>, vector<1x1x128x128xf32>
      %82 = vector.shape_cast %81 : vector<1x1x128x128xf32> to vector<128x128xf32>
      %cst_56 = arith.constant dense<0.000000e+00> : vector<56x128xf32>
      %83 = tpu.matmul %80, %82, %cst_56 {dimension_numbers = #tpu.dot_dimension_numbers<[1], [0], [0], [1], [0, 0, 1, 1], [], []>} : vector<56x128xf32>, vector<128x128xf32>, vector<56x128xf32> -> vector<56x128xf32>
      %c1_57 = arith.constant 1 : index
      %c1_58 = arith.constant 1 : index
      %c0_59 = arith.constant 0 : index
      %c0_60 = arith.constant 0 : index
      %84 = vector.load %arg6[%c1_57, %c1_58, %c0_59, %c0_60] : memref<2x3x1x128xf32, #tpu.memory_space<vmem>>, vector<1x1x1x128xf32>
      %85 = vector.shape_cast %84 : vector<1x1x1x128xf32> to vector<1x128xf32>
      %86 = vector.broadcast %85 : vector<1x128xf32> to vector<56x128xf32>
      %87 = arith.addf %83, %86 : vector<56x128xf32>
      %88 = arith.negf %87 : vector<56x128xf32>
      %89 = math.exp %88 : vector<56x128xf32>
      %cst_61 = arith.constant 1.000000e+00 : f32
      %90 = vector.broadcast %cst_61 : f32 to vector<56x128xf32>
      %91 = arith.addf %90, %89 : vector<56x128xf32>
      %92 = arith.divf %90, %91 : vector<56x128xf32>
      %93 = arith.mulf %87, %92 : vector<56x128xf32>
      %c1_62 = arith.constant 1 : index
      %c2_63 = arith.constant 2 : index
      %c0_64 = arith.constant 0 : index
      %c0_65 = arith.constant 0 : index
      %94 = vector.load %arg5[%c1_62, %c2_63, %c0_64, %c0_65] : memref<2x3x128x128xf32, #tpu.memory_space<vmem>>, vector<1x1x128x128xf32>
      %95 = vector.shape_cast %94 : vector<1x1x128x128xf32> to vector<128x128xf32>
      %cst_66 = arith.constant dense<0.000000e+00> : vector<56x128xf32>
      %96 = tpu.matmul %93, %95, %cst_66 {dimension_numbers = #tpu.dot_dimension_numbers<[1], [0], [0], [1], [0, 0, 1, 1], [], []>} : vector<56x128xf32>, vector<128x128xf32>, vector<56x128xf32> -> vector<56x128xf32>
      %c1_67 = arith.constant 1 : index
      %c2_68 = arith.constant 2 : index
      %c0_69 = arith.constant 0 : index
      %c0_70 = arith.constant 0 : index
      %97 = vector.load %arg6[%c1_67, %c2_68, %c0_69, %c0_70] : memref<2x3x1x128xf32, #tpu.memory_space<vmem>>, vector<1x1x1x128xf32>
      %98 = vector.shape_cast %97 : vector<1x1x1x128xf32> to vector<1x128xf32>
      %99 = vector.broadcast %98 : vector<1x128xf32> to vector<56x128xf32>
      %100 = arith.addf %96, %99 : vector<56x128xf32>
      %101 = arith.negf %100 : vector<56x128xf32>
      %102 = math.exp %101 : vector<56x128xf32>
      %cst_71 = arith.constant 1.000000e+00 : f32
      %103 = vector.broadcast %cst_71 : f32 to vector<56x128xf32>
      %104 = arith.addf %103, %102 : vector<56x128xf32>
      %105 = arith.divf %103, %104 : vector<56x128xf32>
      %106 = arith.mulf %100, %105 : vector<56x128xf32>
      %107 = tpu.concatenate %66, %106 in 1 : vector<56x128xf32>, vector<56x128xf32> -> vector<56x256xf32>
      %c0_72 = arith.constant 0 : index
      %c0_73 = arith.constant 0 : index
      %108 = vector.load %arg7[%c0_72, %c0_73] : memref<256x256xf32, #tpu.memory_space<vmem>>, vector<256x256xf32>
      %cst_74 = arith.constant dense<0.000000e+00> : vector<56x256xf32>
      %109 = tpu.matmul %107, %108, %cst_74 {dimension_numbers = #tpu.dot_dimension_numbers<[1], [0], [0], [1], [0, 0, 1, 1], [], []>} : vector<56x256xf32>, vector<256x256xf32>, vector<56x256xf32> -> vector<56x256xf32>
      %110 = vector.extract_strided_slice %109 {offsets = [0, 0], sizes = [56, 128], strides = [1, 1]} : vector<56x256xf32> to vector<56x128xf32>
      %c0_75 = arith.constant 0 : index
      %c0_76 = arith.constant 0 : index
      %111 = vector.load %arg8[%c0_75, %c0_76] : memref<56x128xf32, #tpu.memory_space<vmem>>, vector<56x128xf32>
      tpu.vector_store %arg8[%c0_75, %c0_76], %110 {strides = array<i32>} : memref<56x128xf32, #tpu.memory_space<vmem>>, vector<56x128xf32>,
      %112 = vector.extract_strided_slice %109 {offsets = [0, 128], sizes = [56, 128], strides = [1, 1]} : vector<56x256xf32> to vector<56x128xf32>
      %c0_77 = arith.constant 0 : index
      %c0_78 = arith.constant 0 : index
      %113 = vector.load %arg9[%c0_77, %c0_78] : memref<56x128xf32, #tpu.memory_space<vmem>>, vector<56x128xf32>
      tpu.vector_store %arg9[%c0_77, %c0_78], %112 {strides = array<i32>} : memref<56x128xf32, #tpu.memory_space<vmem>>, vector<56x128xf32>,
    } else {
    }
    return
  }
  func.func @transform_0(%arg0: i32, %arg1: i32) -> (i32, i32) {
    %c0_i32 = arith.constant 0 : i32
    %c0_i32_0 = arith.constant 0 : i32
    %c0_i32_1 = arith.constant 0 : i32
    return %c0_i32, %c0_i32_0 : i32, i32
  }
  func.func @transform_1(%arg0: i32, %arg1: i32) -> (i32, i32) {
    %c0_i32 = arith.constant 0 : i32
    %c0_i32_0 = arith.constant 0 : i32
    return %c0_i32, %arg1 : i32, i32
  }
  func.func @transform_2(%arg0: i32, %arg1: i32) -> (i32, i32) {
    %c0_i32 = arith.constant 0 : i32
    %c0_i32_0 = arith.constant 0 : i32
    %c0_i32_1 = arith.constant 0 : i32
    return %c0_i32, %c0_i32_0 : i32, i32
  }
  func.func @transform_3(%arg0: i32, %arg1: i32) -> (i32, i32, i32, i32) {
    %c0_i32 = arith.constant 0 : i32
    %c0_i32_0 = arith.constant 0 : i32
    %c0_i32_1 = arith.constant 0 : i32
    %c0_i32_2 = arith.constant 0 : i32
    %c0_i32_3 = arith.constant 0 : i32
    return %c0_i32, %c0_i32_0, %c0_i32_1, %c0_i32_2 : i32, i32, i32, i32
  }
  func.func @transform_4(%arg0: i32, %arg1: i32) -> (i32, i32, i32, i32) {
    %c0_i32 = arith.constant 0 : i32
    %c0_i32_0 = arith.constant 0 : i32
    %c0_i32_1 = arith.constant 0 : i32
    %c0_i32_2 = arith.constant 0 : i32
    %c0_i32_3 = arith.constant 0 : i32
    return %c0_i32, %c0_i32_0, %c0_i32_1, %c0_i32_2 : i32, i32, i32, i32
  }
  func.func @transform_5(%arg0: i32, %arg1: i32) -> (i32, i32) {
    %c0_i32 = arith.constant 0 : i32
    %c0_i32_0 = arith.constant 0 : i32
    %c0_i32_1 = arith.constant 0 : i32
    return %c0_i32, %c0_i32_0 : i32, i32
  }
  func.func @transform_6(%arg0: i32, %arg1: i32) -> (i32, i32) {
    %c0_i32 = arith.constant 0 : i32
    %c0_i32_0 = arith.constant 0 : i32
    return %arg0, %c0_i32 : i32, i32
  }
  func.func @transform_7(%arg0: i32, %arg1: i32) -> (i32, i32) {
    %c0_i32 = arith.constant 0 : i32
    %c0_i32_0 = arith.constant 0 : i32
    return %arg0, %c0_i32 : i32, i32
  }
}

</mosaic_0001>

<llo_original>
// kernel: tpu_custom_call.1
$region0: #{tpu_custom_call.1}
  #allocation0 [shape = 'u32[]', space=smem, size = 0x4, offset = 0x4, fixed_abs, tag = 'smem constant byte address 0x4 - core index']
  #allocation1 [shape = 'u32[72,128]{1,0:T(1,128)}', space=vmem, size = 0x9000, scoped, tag = 'internal scratch']
  #allocation2 [shape = 'f32[56,128]{1,0:T(8,128)}', space=vmem, size = 0x7000, scoped, tag = 'scratch operand']
  %s0 = inlined_call_operand.hbm [shape: bf16[256,128], index: 0, kind: input, shape index: {}]
  %s1 = inlined_call_operand.hbm [shape: s32[1,256], index: 1, kind: input, shape index: {}]
  %s2 = inlined_call_operand.hbm [shape: f32[128,256], index: 2, kind: input, shape index: {}]
  %s3 = inlined_call_operand.hbm [shape: f32[2,3,128,128], index: 3, kind: input, shape index: {}]
  %s4 = inlined_call_operand.hbm [shape: f32[2,3,1,128], index: 4, kind: input, shape index: {}]
  %s5 = inlined_call_operand.hbm [shape: f32[256,256], index: 5, kind: input, shape index: {}]
  %s6 = inlined_call_operand.hbm [shape: f32[56,128], index: 6, kind: output, shape index: {0}]
  %s7 = inlined_call_operand.hbm [shape: f32[56,128], index: 7, kind: output, shape index: {1}]
  %8 = xla_tuple %s6, %s7
  %s9 = sld [smem:[#allocation0]]
  $region74: #{tpu_custom_call.1} parent=0
    _
  %s11 = ssub.s32 1, %s9
  %s12 = scalar_select 0, %s11, %s9
  $region1: #{tpu_custom_call.1} parent=0
    #allocation3 [shape = 'u8[65536]{0}', space=vmem, size = 0x10000, scoped, tag = 'input window, operand 0, single buffered']
    #allocation4 [shape = 's32[1]{0}', space=sflag, size = 0x4, scoped, tag = 'scoped memory for tpu_custom_call.1']
    #allocation5 [shape = 's32[1]{0}', space=sflag, size = 0x4, scoped, tag = 'scoped memory for tpu_custom_call.1']
    #allocation6 [shape = 'u8[1024]{0}', space=vmem, size = 0x400, scoped, tag = 'input window, operand 1, single buffered']
    #allocation7 [shape = 's32[1]{0}', space=sflag, size = 0x4, scoped, tag = 'scoped memory for tpu_custom_call.1']
    #allocation8 [shape = 'u8[131072]{0}', space=vmem, size = 0x20000, scoped, tag = 'input window, operand 2, single buffered']
    #allocation9 [shape = 'u8[393216]{0}', space=vmem, size = 0x60000, scoped, tag = 'input window, operand 3, single buffered']
    #allocation10 [shape = 's32[1]{0}', space=sflag, size = 0x4, scoped, tag = 'scoped memory for tpu_custom_call.1']
    #allocation11 [shape = 'u8[3072]{0}', space=vmem, size = 0xc00, scoped, tag = 'input window, operand 4, single buffered']
    #allocation12 [shape = 'u8[262144]{0}', space=vmem, size = 0x40000, scoped, tag = 'input window, operand 5, single buffered']
    #allocation13 [shape = 's32[1]{0}', space=sflag, size = 0x4, scoped, tag = 'scoped memory for tpu_custom_call.1']
    #allocation14 [shape = 'u8[28672]{0}', space=vmem, size = 0x7000, scoped, tag = 'output window, operand 0, single buffered']
    #allocation15 [shape = 'u8[28672]{0}', space=vmem, size = 0x7000, scoped, tag = 'output window, operand 1, single buffered']
    #allocation16 [shape = 's32[1]{0}', space=sflag, size = 0x4, scoped, tag = 'scoped memory for tpu_custom_call.1']
    %13 = vsyncpa [#allocation4], 0
    %14 = vsyncpa [#allocation7], 0
    %15 = vsyncpa [#allocation10], 0
    %16 = vsyncpa [#allocation13], 0
    %17 = vsyncpa [#allocation5], 0
    %18 = vsyncpa [#allocation16], 0
    // Predicated region
    $region2: #{tpu_custom_call.1} parent=1 // pred_check
      _
    $region3: #{tpu_custom_call.1} parent=1 // pred_check_branch
      %20 = sbr.rel (0) target = $region5
    $region4: #{tpu_custom_call.1} parent=1 // pred_region
      %22 = vsyncadd [#allocation4], 0
      %s23 = sshll.u32 %s0, 4
      %s24 = int_to_ptr.hbm [resolvable:$true] %s23
      %s25 = sshll.u32 [#allocation3], 4
      %s26 = int_to_ptr.vmem [resolvable:$true] %s25
      %31 = dma.hbm_to_vmem [thread:$0]  %s24, 2048, %s26, [#allocation4], 64, 64, 4
    $region5: #{tpu_custom_call.1} parent=1 // pred_fallthru
      _
    // Predicated region
    $region6: #{tpu_custom_call.1} parent=1 // pred_check
      _
    $region7: #{tpu_custom_call.1} parent=1 // pred_check_branch
      %33 = sbr.rel (0) target = $region9
    $region8: #{tpu_custom_call.1} parent=1 // pred_region
      %35 = vsyncadd [#allocation7], 0
      %s37 = sshll.u32 %s1, 4
      %s38 = int_to_ptr.hbm [resolvable:$true] %s37
      %s39 = sshll.u32 [#allocation6], 4
      %s40 = int_to_ptr.vmem [resolvable:$true] %s39
      %42 = dma.hbm_to_vmem [thread:$0]  %s38, 32, %s40, [#allocation7]
    $region9: #{tpu_custom_call.1} parent=1 // pred_fallthru
      _
    // Predicated region
    $region10: #{tpu_custom_call.1} parent=1 // pred_check
      _
    $region11: #{tpu_custom_call.1} parent=1 // pred_check_branch
      %44 = sbr.rel (0) target = $region13
    $region12: #{tpu_custom_call.1} parent=1 // pred_region
      %46 = vsyncadd [#allocation7], 0
      %s47 = sshll.u32 %s2, 4
      %s48 = int_to_ptr.hbm [resolvable:$true] %s47
      %s49 = sshll.u32 [#allocation8], 4
      %s50 = int_to_ptr.vmem [resolvable:$true] %s49
      %55 = dma.hbm_to_vmem [thread:$0]  %s48, 4096, %s50, [#allocation7], 256, 256, 16
    $region13: #{tpu_custom_call.1} parent=1 // pred_fallthru
      _
    // Predicated region
    $region14: #{tpu_custom_call.1} parent=1 // pred_check
      _
    $region15: #{tpu_custom_call.1} parent=1 // pred_check_branch
      %57 = sbr.rel (0) target = $region17
    $region16: #{tpu_custom_call.1} parent=1 // pred_region
      %59 = vsyncadd [#allocation10], 0
      %s60 = sshll.u32 %s3, 4
      %s61 = int_to_ptr.hbm [resolvable:$true] %s60
      %s62 = sshll.u32 [#allocation9], 4
      %s63 = int_to_ptr.vmem [resolvable:$true] %s62
      %68 = dma.hbm_to_vmem [thread:$0]  %s61, 12288, %s63, [#allocation10], 128, 128, 8
    $region17: #{tpu_custom_call.1} parent=1 // pred_fallthru
      _
    // Predicated region
    $region18: #{tpu_custom_call.1} parent=1 // pred_check
      _
    $region19: #{tpu_custom_call.1} parent=1 // pred_check_branch
      %70 = sbr.rel (0) target = $region21
    $region20: #{tpu_custom_call.1} parent=1 // pred_region
      %72 = vsyncadd [#allocation10], 0
      %s73 = sshll.u32 %s4, 4
      %s74 = int_to_ptr.hbm [resolvable:$true] %s73
      %s75 = sshll.u32 [#allocation11], 4
      %s76 = int_to_ptr.vmem [resolvable:$true] %s75
      %81 = dma.hbm_to_vmem [thread:$0]  %s74, 96, %s76, [#allocation10], 16, 16, 1
    $region21: #{tpu_custom_call.1} parent=1 // pred_fallthru
      _
    // Predicated region
    $region22: #{tpu_custom_call.1} parent=1 // pred_check
      _
    $region23: #{tpu_custom_call.1} parent=1 // pred_check_branch
      %83 = sbr.rel (0) target = $region25
    $region24: #{tpu_custom_call.1} parent=1 // pred_region
      %85 = vsyncadd [#allocation13], 0
      %s86 = sshll.u32 %s5, 4
      %s87 = int_to_ptr.hbm [resolvable:$true] %s86
      %s88 = sshll.u32 [#allocation12], 4
      %s89 = int_to_ptr.vmem [resolvable:$true] %s88
      %94 = dma.hbm_to_vmem [thread:$0]  %s87, 8192, %s89, [#allocation13], 256, 256, 16
    $region25: #{tpu_custom_call.1} parent=1 // pred_fallthru
      _
    // Predicated region
    $region26: #{tpu_custom_call.1} parent=1 // pred_check
      _
    $region27: #{tpu_custom_call.1} parent=1 // pred_check_branch
      %96 = sbr.rel (0) target = $region29
    $region28: #{tpu_custom_call.1} parent=1 // pred_region
      %98 = dma.done [#allocation4], 2048
    $region29: #{tpu_custom_call.1} parent=1 // pred_fallthru
      _
    // Predicated region
    $region30: #{tpu_custom_call.1} parent=1 // pred_check
      _
    $region31: #{tpu_custom_call.1} parent=1 // pred_check_branch
      %100 = sbr.rel (0) target = $region33
    $region32: #{tpu_custom_call.1} parent=1 // pred_region
      %102 = dma.done [#allocation7], 32
    $region33: #{tpu_custom_call.1} parent=1 // pred_fallthru
      _
    // Predicated region
    $region34: #{tpu_custom_call.1} parent=1 // pred_check
      _
    $region35: #{tpu_custom_call.1} parent=1 // pred_check_branch
      %104 = sbr.rel (0) target = $region37
    $region36: #{tpu_custom_call.1} parent=1 // pred_region
      %106 = dma.done [#allocation7], 4096
    $region37: #{tpu_custom_call.1} parent=1 // pred_fallthru
      _
    // Predicated region
    $region38: #{tpu_custom_call.1} parent=1 // pred_check
      _
    $region39: #{tpu_custom_call.1} parent=1 // pred_check_branch
      %108 = sbr.rel (0) target = $region41
    $region40: #{tpu_custom_call.1} parent=1 // pred_region
      %110 = dma.done [#allocation10], 12288
    $region41: #{tpu_custom_call.1} parent=1 // pred_fallthru
      _
    // Predicated region
    $region42: #{tpu_custom_call.1} parent=1 // pred_check
      _
    $region43: #{tpu_custom_call.1} parent=1 // pred_check_branch
      %112 = sbr.rel (0) target = $region45
    $region44: #{tpu_custom_call.1} parent=1 // pred_region
      %114 = dma.done [#allocation10], 96
    $region45: #{tpu_custom_call.1} parent=1 // pred_fallthru
      _
    // Predicated region
    $region46: #{tpu_custom_call.1} parent=1 // pred_check
      _
    $region47: #{tpu_custom_call.1} parent=1 // pred_check_branch
      %116 = sbr.rel (0) target = $region49
    $region48: #{tpu_custom_call.1} parent=1 // pred_region
      %118 = dma.done [#allocation13], 8192
    $region49: #{tpu_custom_call.1} parent=1 // pred_fallthru
      _
    %p119 = scmp.eq.s32.totalorder 0, 0
    // Predicated region
    $region50: #{tpu_custom_call.1} parent=1 // pred_check
      %p120 = pneg %p119
    $region51: #{tpu_custom_call.1} parent=1 // pred_check_branch
      %122 = sbr.rel (%p120) target = $region53
    $region52: #{tpu_custom_call.1} parent=1 // pred_region
      %123 = vst [vmem:[#allocation2] sm:$0xff] 0.0
      %124 = vst [vmem:[#allocation2 + $0x8] sm:$0xff] 0.0
      %125 = vst [vmem:[#allocation2 + $0x10] sm:$0xff] 0.0
      %126 = vst [vmem:[#allocation2 + $0x18] sm:$0xff] 0.0
      %127 = vst [vmem:[#allocation2 + $0x20] sm:$0xff] 0.0
      %128 = vst [vmem:[#allocation2 + $0x28] sm:$0xff] 0.0
      %129 = vst [vmem:[#allocation2 + $0x30] sm:$0xff] 0.0
    $region53: #{tpu_custom_call.1} parent=1 // pred_fallthru
      _
    %s130 = smul.u32 0, 256
    %s131 = sshra.s32 %s130, 3
    %s132 = sand.u32 %s130, 7
    %s133 = smul.addr %s131, 4
    %s134 = scalar_lea.vmem [#allocation3], %s133
    %v135 = vld [vmem:[%s134] sm:$0xf]
    %v136 = vld [vmem:[%s134 + $0x4] sm:$0xf]
    %v137 = vld [vmem:[%s134 + $0x8] sm:$0xf]
    %v138 = vld [vmem:[%s134 + $0xc] sm:$0xf]
    %v139 = vld [vmem:[%s134 + $0x10] sm:$0xf]
    %v140 = vld [vmem:[%s134 + $0x14] sm:$0xf]
    %v141 = vld [vmem:[%s134 + $0x18] sm:$0xf]
    %v142 = vld [vmem:[%s134 + $0x1c] sm:$0xf]
    %v143 = vld [vmem:[%s134 + $0x20] sm:$0xf]
    %v144 = vld [vmem:[%s134 + $0x24] sm:$0xf]
    %v145 = vld [vmem:[%s134 + $0x28] sm:$0xf]
    %v146 = vld [vmem:[%s134 + $0x2c] sm:$0xf]
    %v147 = vld [vmem:[%s134 + $0x30] sm:$0xf]
    %v148 = vld [vmem:[%s134 + $0x34] sm:$0xf]
    %v149 = vld [vmem:[%s134 + $0x38] sm:$0xf]
    %v150 = vld [vmem:[%s134 + $0x3c] sm:$0xf]
    %v151 = vld [vmem:[%s134 + $0x40] sm:$0xf]
    %v152 = vld [vmem:[%s134 + $0x44] sm:$0xf]
    %v153 = vld [vmem:[%s134 + $0x48] sm:$0xf]
    %v154 = vld [vmem:[%s134 + $0x4c] sm:$0xf]
    %v155 = vld [vmem:[%s134 + $0x50] sm:$0xf]
    %v156 = vld [vmem:[%s134 + $0x54] sm:$0xf]
    %v157 = vld [vmem:[%s134 + $0x58] sm:$0xf]
    %v158 = vld [vmem:[%s134 + $0x5c] sm:$0xf]
    %v159 = vld [vmem:[%s134 + $0x60] sm:$0xf]
    %v160 = vld [vmem:[%s134 + $0x64] sm:$0xf]
    %v161 = vld [vmem:[%s134 + $0x68] sm:$0xf]
    %v162 = vld [vmem:[%s134 + $0x6c] sm:$0xf]
    %v163 = vld [vmem:[%s134 + $0x70] sm:$0xf]
    %v164 = vld [vmem:[%s134 + $0x74] sm:$0xf]
    %v165 = vld [vmem:[%s134 + $0x78] sm:$0xf]
    %v166 = vld [vmem:[%s134 + $0x7c] sm:$0xf]
    %s167 = smul.u32 0, 56
    %v168 = vld [vmem:[#allocation6] sm:$0x3]
    %v169 = vstv %s167
    %v170 = vsub.s32 %v168, %v169
    %v171 = vlaneseq
    %v172 = vshrl.u32 %v171, 7
    %v173 = vadd.s32 %v172, 8
    %v174 = vadd.s32 %v172, 16
    %v175 = vadd.s32 %v172, 24
    %v176 = vadd.s32 %v172, 32
    %v177 = vadd.s32 %v172, 40
    %v178 = vadd.s32 %v172, 48
    %v179 = vperm.slane %v170, 0
    %v180 = vperm.slane %v170, 1
    %vm181 = vcmp.eq.s32.totalorder %v172, %v179
    %vm182 = vcmp.eq.s32.totalorder %v172, %v180
    %vm183 = vcmp.eq.s32.totalorder %v173, %v179
    %vm184 = vcmp.eq.s32.totalorder %v173, %v180
    %vm185 = vcmp.eq.s32.totalorder %v174, %v179
    %vm186 = vcmp.eq.s32.totalorder %v174, %v180
    %vm187 = vcmp.eq.s32.totalorder %v175, %v179
    %vm188 = vcmp.eq.s32.totalorder %v175, %v180
    %vm189 = vcmp.eq.s32.totalorder %v176, %v179
    %vm190 = vcmp.eq.s32.totalorder %v176, %v180
    %vm191 = vcmp.eq.s32.totalorder %v177, %v179
    %vm192 = vcmp.eq.s32.totalorder %v177, %v180
    %vm193 = vcmp.eq.s32.totalorder %v178, %v179
    %vm194 = vcmp.eq.s32.totalorder %v178, %v180
    %v195 = vsel %vm181, 1, 0
    %v196 = vsel %vm182, 1, 0
    %v197 = vsel %vm183, 1, 0
    %v198 = vsel %vm184, 1, 0
    %v199 = vsel %vm185, 1, 0
    %v200 = vsel %vm186, 1, 0
    %v201 = vsel %vm187, 1, 0
    %v202 = vsel %vm188, 1, 0
    %v203 = vsel %vm189, 1, 0
    %v204 = vsel %vm190, 1, 0
    %v205 = vsel %vm191, 1, 0
    %v206 = vsel %vm192, 1, 0
    %v207 = vsel %vm193, 1, 0
    %v208 = vsel %vm194, 1, 0
    %v209 = vcvt.s32.f32 %v195
    %v210 = vcvt.s32.f32 %v196
    %v211 = vcvt.s32.f32 %v197
    %v212 = vcvt.s32.f32 %v198
    %v213 = vcvt.s32.f32 %v199
    %v214 = vcvt.s32.f32 %v200
    %v215 = vcvt.s32.f32 %v201
    %v216 = vcvt.s32.f32 %v202
    %v217 = vcvt.s32.f32 %v203
    %v218 = vcvt.s32.f32 %v204
    %v219 = vcvt.s32.f32 %v205
    %v220 = vcvt.s32.f32 %v206
    %v221 = vcvt.s32.f32 %v207
    %v222 = vcvt.s32.f32 %v208
    %v223 = vpack.c.bf16 %v211, %v209
    %v224 = vpack.c.bf16 %v212, %v210
    %v225 = vpack.c.bf16 %v215, %v213
    %v226 = vpack.c.bf16 %v216, %v214
    %v227 = vpack.c.bf16 %v219, %v217
    %v228 = vpack.c.bf16 %v220, %v218
    %v229 = vpack.c.bf16 %v221, %v221
    %v230 = vpack.c.bf16 %v222, %v222
    %v231 = vld [vmem:[#allocation2] sm:$0xff]
    %v232 = vld [vmem:[#allocation2 + $0x8] sm:$0xff]
    %v233 = vld [vmem:[#allocation2 + $0x10] sm:$0xff]
    %v234 = vld [vmem:[#allocation2 + $0x18] sm:$0xff]
    %v235 = vld [vmem:[#allocation2 + $0x20] sm:$0xff]
    %v236 = vld [vmem:[#allocation2 + $0x28] sm:$0xff]
    %v237 = vld [vmem:[#allocation2 + $0x30] sm:$0xff]
    %v270 = vunpack.c.l.b16 %v135
    %v271 = vunpack.c.l.b16 %v136
    %v272 = vunpack.c.l.b16 %v137
    %v273 = vunpack.c.l.b16 %v138
    %v274 = vunpack.c.l.b16 %v139
    %v275 = vunpack.c.l.b16 %v140
    %v276 = vunpack.c.l.b16 %v141
    %v277 = vunpack.c.l.b16 %v142
    %v278 = vunpack.c.l.b16 %v143
    %v279 = vunpack.c.l.b16 %v144
    %v280 = vunpack.c.l.b16 %v145
    %v281 = vunpack.c.l.b16 %v146
    %v282 = vunpack.c.l.b16 %v147
    %v283 = vunpack.c.l.b16 %v148
    %v284 = vunpack.c.l.b16 %v149
    %v285 = vunpack.c.l.b16 %v150
    %v286 = vunpack.c.l.b16 %v151
    %v287 = vunpack.c.l.b16 %v152
    %v288 = vunpack.c.l.b16 %v153
    %v289 = vunpack.c.l.b16 %v154
    %v290 = vunpack.c.l.b16 %v155
    %v291 = vunpack.c.l.b16 %v156
    %v292 = vunpack.c.l.b16 %v157
    %v293 = vunpack.c.l.b16 %v158
    %v294 = vunpack.c.l.b16 %v159
    %v295 = vunpack.c.l.b16 %v160
    %v296 = vunpack.c.l.b16 %v161
    %v297 = vunpack.c.l.b16 %v162
    %v298 = vunpack.c.l.b16 %v163
    %v299 = vunpack.c.l.b16 %v164
    %v300 = vunpack.c.l.b16 %v165
    %v301 = vunpack.c.l.b16 %v166
    %v302 = vpack.c.b16 %v271, %v270
    %v303 = vpack.c.b16 %v273, %v272
    %v304 = vpack.c.b16 %v275, %v274
    %v305 = vpack.c.b16 %v277, %v276
    %v306 = vpack.c.b16 %v279, %v278
    %v307 = vpack.c.b16 %v281, %v280
    %v308 = vpack.c.b16 %v283, %v282
    %v309 = vpack.c.b16 %v285, %v284
    %v310 = vpack.c.b16 %v287, %v286
    %v311 = vpack.c.b16 %v289, %v288
    %v312 = vpack.c.b16 %v291, %v290
    %v313 = vpack.c.b16 %v293, %v292
    %v314 = vpack.c.b16 %v295, %v294
    %v315 = vpack.c.b16 %v297, %v296
    %v316 = vpack.c.b16 %v299, %v298
    %v317 = vpack.c.b16 %v301, %v300
    %334 = vmatpush.bf16.msra.mxu0 %v309
    %335 = vmatpush.bf16.msra.mxu0 %v308
    %336 = vmatpush.bf16.msra.mxu0 %v307
    %337 = vmatpush.bf16.msra.mxu0 %v306
    %338 = vmatpush.bf16.msra.mxu0 %v305
    %339 = vmatpush.bf16.msra.mxu0 %v304
    %340 = vmatpush.bf16.msra.mxu0 %v303
    %341 = vmatpush.bf16.msra.mxu0 %v302
    %342 = vmatmul.bf16.gmra.mxu0 %v223
    %v343 = vpop.f32.mrf.mxu0
    %v344 = vadd.f32 0.0, %v343
    %v345 = vpop.f32.mrf.mxu0
    %v346 = vadd.f32 0.0, %v345
    %347 = vmatmul.bf16.gmra.mxu0 %v225
    %v348 = vpop.f32.mrf.mxu0
    %v349 = vadd.f32 0.0, %v348
    %v350 = vpop.f32.mrf.mxu0
    %v351 = vadd.f32 0.0, %v350
    %352 = vmatmul.bf16.gmra.mxu0 %v227
    %v353 = vpop.f32.mrf.mxu0
    %v354 = vadd.f32 0.0, %v353
    %v355 = vpop.f32.mrf.mxu0
    %v356 = vadd.f32 0.0, %v355
    %357 = vmatmul.bf16.gmra.mxu0 %v229
    %v358 = vpop.f32.mrf.mxu0
    %v359 = vadd.f32 0.0, %v358
    %v360 = vpop.f32.mrf.mxu0
    %361 = vdwg.mxu0
    %362 = vmatpush.bf16.msra.mxu0 %v317
    %363 = vmatpush.bf16.msra.mxu0 %v316
    %364 = vmatpush.bf16.msra.mxu0 %v315
    %365 = vmatpush.bf16.msra.mxu0 %v314
    %366 = vmatpush.bf16.msra.mxu0 %v313
    %367 = vmatpush.bf16.msra.mxu0 %v312
    %368 = vmatpush.bf16.msra.mxu0 %v311
    %369 = vmatpush.bf16.msra.mxu0 %v310
    %370 = vmatmul.bf16.gmra.mxu0 %v224
    %v371 = vpop.f32.mrf.mxu0
    %v372 = vadd.f32 %v344, %v371
    %v373 = vpop.f32.mrf.mxu0
    %v374 = vadd.f32 %v346, %v373
    %375 = vmatmul.bf16.gmra.mxu0 %v226
    %v376 = vpop.f32.mrf.mxu0
    %v377 = vadd.f32 %v349, %v376
    %v378 = vpop.f32.mrf.mxu0
    %v379 = vadd.f32 %v351, %v378
    %380 = vmatmul.bf16.gmra.mxu0 %v228
    %v381 = vpop.f32.mrf.mxu0
    %v382 = vadd.f32 %v354, %v381
    %v383 = vpop.f32.mrf.mxu0
    %v384 = vadd.f32 %v356, %v383
    %385 = vmatmul.bf16.gmra.mxu0 %v230
    %v386 = vpop.f32.mrf.mxu0
    %v387 = vadd.f32 %v359, %v386
    %v388 = vpop.f32.mrf.mxu0
    %389 = vdwg.mxu0
    %v390 = vadd.f32 %v231, %v372
    %v391 = vadd.f32 %v232, %v374
    %v392 = vadd.f32 %v233, %v377
    %v393 = vadd.f32 %v234, %v379
    %v394 = vadd.f32 %v235, %v382
    %v395 = vadd.f32 %v236, %v384
    %v396 = vadd.f32 %v237, %v387
    %397 = vst [vmem:[#allocation2] sm:$0xff] %v390
    %398 = vst [vmem:[#allocation2 + $0x8] sm:$0xff] %v391
    %399 = vst [vmem:[#allocation2 + $0x10] sm:$0xff] %v392
    %400 = vst [vmem:[#allocation2 + $0x18] sm:$0xff] %v393
    %401 = vst [vmem:[#allocation2 + $0x20] sm:$0xff] %v394
    %402 = vst [vmem:[#allocation2 + $0x28] sm:$0xff] %v395
    %403 = vst [vmem:[#allocation2 + $0x30] sm:$0xff] %v396
    // Predicated region
    $region54: #{tpu_custom_call.1} parent=1 // pred_check
      %p404 = pneg %p119
    $region55: #{tpu_custom_call.1} parent=1 // pred_check_branch
      %406 = sbr.rel (%p404) target = $region57
    $region56: #{tpu_custom_call.1} parent=1 // pred_region
      %v407 = vld [vmem:[#allocation2] sm:$0xff]
      %v408 = vld [vmem:[#allocation2 + $0x8] sm:$0xff]
      %v409 = vld [vmem:[#allocation2 + $0x10] sm:$0xff]
      %v410 = vld [vmem:[#allocation2 + $0x18] sm:$0xff]
      %v411 = vld [vmem:[#allocation2 + $0x20] sm:$0xff]
      %v412 = vld [vmem:[#allocation2 + $0x28] sm:$0xff]
      %v413 = vld [vmem:[#allocation2 + $0x30] sm:$0xff]
      %v414 = vld [vmem:[#allocation8] sm:$0xff]
      %v415 = vld [vmem:[#allocation8 + $0x8] sm:$0xff]
      %v416 = vld [vmem:[#allocation8 + $0x10] sm:$0xff]
      %v417 = vld [vmem:[#allocation8 + $0x18] sm:$0xff]
      %v418 = vld [vmem:[#allocation8 + $0x20] sm:$0xff]
      %v419 = vld [vmem:[#allocation8 + $0x28] sm:$0xff]
      %v420 = vld [vmem:[#allocation8 + $0x30] sm:$0xff]
      %v421 = vld [vmem:[#allocation8 + $0x38] sm:$0xff]
      %v422 = vld [vmem:[#allocation8 + $0x40] sm:$0xff]
      %v423 = vld [vmem:[#allocation8 + $0x48] sm:$0xff]
      %v424 = vld [vmem:[#allocation8 + $0x50] sm:$0xff]
      %v425 = vld [vmem:[#allocation8 + $0x58] sm:$0xff]
      %v426 = vld [vmem:[#allocation8 + $0x60] sm:$0xff]
      %v427 = vld [vmem:[#allocation8 + $0x68] sm:$0xff]
      %v428 = vld [vmem:[#allocation8 + $0x70] sm:$0xff]
      %v429 = vld [vmem:[#allocation8 + $0x78] sm:$0xff]
      %v430 = vld [vmem:[#allocation8 + $0x80] sm:$0xff]
      %v431 = vld [vmem:[#allocation8 + $0x88] sm:$0xff]
      %v432 = vld [vmem:[#allocation8 + $0x90] sm:$0xff]
      %v433 = vld [vmem:[#allocation8 + $0x98] sm:$0xff]
      %v434 = vld [vmem:[#allocation8 + $0xa0] sm:$0xff]
      %v435 = vld [vmem:[#allocation8 + $0xa8] sm:$0xff]
      %v436 = vld [vmem:[#allocation8 + $0xb0] sm:$0xff]
      %v437 = vld [vmem:[#allocation8 + $0xb8] sm:$0xff]
      %v438 = vld [vmem:[#allocation8 + $0xc0] sm:$0xff]
      %v439 = vld [vmem:[#allocation8 + $0xc8] sm:$0xff]
      %v440 = vld [vmem:[#allocation8 + $0xd0] sm:$0xff]
      %v441 = vld [vmem:[#allocation8 + $0xd8] sm:$0xff]
      %v442 = vld [vmem:[#allocation8 + $0xe0] sm:$0xff]
      %v443 = vld [vmem:[#allocation8 + $0xe8] sm:$0xff]
      %v444 = vld [vmem:[#allocation8 + $0xf0] sm:$0xff]
      %v445 = vld [vmem:[#allocation8 + $0xf8] sm:$0xff]
      %446 = vmatpush.msra.mxu0 %v444
      %447 = vmatpush.msra.mxu0 %v442
      %448 = vmatpush.msra.mxu0 %v440
      %449 = vmatpush.msra.mxu0 %v438
      %450 = vmatpush.msra.mxu0 %v436
      %451 = vmatpush.msra.mxu0 %v434
      %452 = vmatpush.msra.mxu0 %v432
      %453 = vmatpush.msra.mxu0 %v430
      %454 = vmatpush.msra.mxu0 %v428
      %455 = vmatpush.msra.mxu0 %v426
      %456 = vmatpush.msra.mxu0 %v424
      %457 = vmatpush.msra.mxu0 %v422
      %458 = vmatpush.msra.mxu0 %v420
      %459 = vmatpush.msra.mxu0 %v418
      %460 = vmatpush.msra.mxu0 %v416
      %461 = vmatpush.msra.mxu0 %v414
      %462 = vmatmul.f32.gmra.mxu0 %v407
      %v463 = vpop.f32.mrf.mxu0
      %v464 = vadd.f32 0.0, %v463
      %465 = vmatmul.f32.gmra.mxu0 %v408
      %v466 = vpop.f32.mrf.mxu0
      %v467 = vadd.f32 0.0, %v466
      %468 = vmatmul.f32.gmra.mxu0 %v409
      %v469 = vpop.f32.mrf.mxu0
      %v470 = vadd.f32 0.0, %v469
      %471 = vmatmul.f32.gmra.mxu0 %v410
      %v472 = vpop.f32.mrf.mxu0
      %v473 = vadd.f32 0.0, %v472
      %474 = vmatmul.f32.gmra.mxu0 %v411
      %v475 = vpop.f32.mrf.mxu0
      %v476 = vadd.f32 0.0, %v475
      %477 = vmatmul.f32.gmra.mxu0 %v412
      %v478 = vpop.f32.mrf.mxu0
      %v479 = vadd.f32 0.0, %v478
      %480 = vmatmul.f32.gmra.mxu0 %v413
      %v481 = vpop.f32.mrf.mxu0
      %v482 = vadd.f32 0.0, %v481
      %483 = vdwg.mxu0
      %484 = vmatpush.msra.mxu0 %v445
      %485 = vmatpush.msra.mxu0 %v443
      %486 = vmatpush.msra.mxu0 %v441
      %487 = vmatpush.msra.mxu0 %v439
      %488 = vmatpush.msra.mxu0 %v437
      %489 = vmatpush.msra.mxu0 %v435
      %490 = vmatpush.msra.mxu0 %v433
      %491 = vmatpush.msra.mxu0 %v431
      %492 = vmatpush.msra.mxu0 %v429
      %493 = vmatpush.msra.mxu0 %v427
      %494 = vmatpush.msra.mxu0 %v425
      %495 = vmatpush.msra.mxu0 %v423
      %496 = vmatpush.msra.mxu0 %v421
      %497 = vmatpush.msra.mxu0 %v419
      %498 = vmatpush.msra.mxu0 %v417
      %499 = vmatpush.msra.mxu0 %v415
      %500 = vmatmul.f32.gmra.mxu0 %v407
      %v501 = vpop.f32.mrf.mxu0
      %v502 = vadd.f32 0.0, %v501
      %503 = vmatmul.f32.gmra.mxu0 %v408
      %v504 = vpop.f32.mrf.mxu0
      %v505 = vadd.f32 0.0, %v504
      %506 = vmatmul.f32.gmra.mxu0 %v409
      %v507 = vpop.f32.mrf.mxu0
      %v508 = vadd.f32 0.0, %v507
      %509 = vmatmul.f32.gmra.mxu0 %v410
      %v510 = vpop.f32.mrf.mxu0
      %v511 = vadd.f32 0.0, %v510
      %512 = vmatmul.f32.gmra.mxu0 %v411
      %v513 = vpop.f32.mrf.mxu0
      %v514 = vadd.f32 0.0, %v513
      %515 = vmatmul.f32.gmra.mxu0 %v412
      %v516 = vpop.f32.mrf.mxu0
      %v517 = vadd.f32 0.0, %v516
      %518 = vmatmul.f32.gmra.mxu0 %v413
      %v519 = vpop.f32.mrf.mxu0
      %v520 = vadd.f32 0.0, %v519
      %521 = vdwg.mxu0
      %v522 = vld [vmem:[#allocation9] sm:$0xff]
      %v523 = vld [vmem:[#allocation9 + $0x8] sm:$0xff]
      %v524 = vld [vmem:[#allocation9 + $0x10] sm:$0xff]
      %v525 = vld [vmem:[#allocation9 + $0x18] sm:$0xff]
      %v526 = vld [vmem:[#allocation9 + $0x20] sm:$0xff]
      %v527 = vld [vmem:[#allocation9 + $0x28] sm:$0xff]
      %v528 = vld [vmem:[#allocation9 + $0x30] sm:$0xff]
      %v529 = vld [vmem:[#allocation9 + $0x38] sm:$0xff]
      %v530 = vld [vmem:[#allocation9 + $0x40] sm:$0xff]
      %v531 = vld [vmem:[#allocation9 + $0x48] sm:$0xff]
      %v532 = vld [vmem:[#allocation9 + $0x50] sm:$0xff]
      %v533 = vld [vmem:[#allocation9 + $0x58] sm:$0xff]
      %v534 = vld [vmem:[#allocation9 + $0x60] sm:$0xff]
      %v535 = vld [vmem:[#allocation9 + $0x68] sm:$0xff]
      %v536 = vld [vmem:[#allocation9 + $0x70] sm:$0xff]
      %v537 = vld [vmem:[#allocation9 + $0x78] sm:$0xff]
      %v538 = vld [vmem:[#allocation11] sm:$0x1]
      %v540 = vperm.slane %v538, 0
      %542 = vmatpush.msra.mxu0 %v537
      %543 = vmatpush.msra.mxu0 %v536
      %544 = vmatpush.msra.mxu0 %v535
      %545 = vmatpush.msra.mxu0 %v534
      %546 = vmatpush.msra.mxu0 %v533
      %547 = vmatpush.msra.mxu0 %v532
      %548 = vmatpush.msra.mxu0 %v531
      %549 = vmatpush.msra.mxu0 %v530
      %550 = vmatpush.msra.mxu0 %v529
      %551 = vmatpush.msra.mxu0 %v528
      %552 = vmatpush.msra.mxu0 %v527
      %553 = vmatpush.msra.mxu0 %v526
      %554 = vmatpush.msra.mxu0 %v525
      %555 = vmatpush.msra.mxu0 %v524
      %556 = vmatpush.msra.mxu0 %v523
      %557 = vmatpush.msra.mxu0 %v522
      %558 = vmatmul.f32.gmra.mxu0 %v464
      %v559 = vpop.f32.mrf.mxu0
      %v560 = vadd.f32 %v540, %v559
      %561 = vmatmul.f32.gmra.mxu0 %v467
      %v562 = vpop.f32.mrf.mxu0
      %v563 = vadd.f32 %v540, %v562
      %564 = vmatmul.f32.gmra.mxu0 %v470
      %v565 = vpop.f32.mrf.mxu0
      %v566 = vadd.f32 %v540, %v565
      %567 = vmatmul.f32.gmra.mxu0 %v473
      %v568 = vpop.f32.mrf.mxu0
      %v569 = vadd.f32 %v540, %v568
      %570 = vmatmul.f32.gmra.mxu0 %v476
      %v571 = vpop.f32.mrf.mxu0
      %v572 = vadd.f32 %v540, %v571
      %573 = vmatmul.f32.gmra.mxu0 %v479
      %v574 = vpop.f32.mrf.mxu0
      %v575 = vadd.f32 %v540, %v574
      %576 = vmatmul.f32.gmra.mxu0 %v482
      %v577 = vpop.f32.mrf.mxu0
      %v578 = vadd.f32 %v540, %v577
      %579 = vdwg.mxu0
      %v580 = vxor.u32 %v560, 2147483648
      %v581 = vxor.u32 %v563, 2147483648
      %v582 = vxor.u32 %v566, 2147483648
      %v583 = vxor.u32 %v569, 2147483648
      %v584 = vxor.u32 %v572, 2147483648
      %v585 = vxor.u32 %v575, 2147483648
      %v586 = vxor.u32 %v578, 2147483648
      %v587 = vmul.f32 %v580, 1.442695
      %v588 = vpow.pop %v587
      %v589 = vmul.f32 %v581, 1.442695
      %v590 = vpow.pop %v589
      %v591 = vmul.f32 %v582, 1.442695
      %v592 = vpow.pop %v591
      %v593 = vmul.f32 %v583, 1.442695
      %v594 = vpow.pop %v593
      %v595 = vmul.f32 %v584, 1.442695
      %v596 = vpow.pop %v595
      %v597 = vmul.f32 %v585, 1.442695
      %v598 = vpow.pop %v597
      %v599 = vmul.f32 %v586, 1.442695
      %v600 = vpow.pop %v599
      %v601 = vadd.f32 %v588, 1.0
      %v602 = vadd.f32 %v590, 1.0
      %v603 = vadd.f32 %v592, 1.0
      %v604 = vadd.f32 %v594, 1.0
      %v605 = vadd.f32 %v596, 1.0
      %v606 = vadd.f32 %v598, 1.0
      %v607 = vadd.f32 %v600, 1.0
      %v608 = vrcp.pop %v601
      %v609 = vmul.f32 %v601, %v608
      %v610 = vsub.f32 1.0, %v609
      %v611 = vmul.f32 %v608, %v610
      %v612 = vadd.f32 %v608, %v611
      %vm613 = vweird.f32 %v601
      %vm614 = vweird.f32 %v608
      %vm615 = vmor %vm613, %vm614
      %v616 = vsel %vm615, %v608, %v612
      %v617 = vand.u32 2147483647, %v601
      %vm618 = vcmp.eq.f32.partialorder %v617, 8.507059e+37
      %v619 = vand.u32 %v601, 2147483648
      %v620 = vor.u32 1.1754944e-38, %v619
      %v621 = vsel %vm618, %v620, %v616
      %v622 = vmul.f32 1.0, %v621
      %v623 = vrcp.pop %v602
      %v624 = vmul.f32 %v602, %v623
      %v625 = vsub.f32 1.0, %v624
      %v626 = vmul.f32 %v623, %v625
      %v627 = vadd.f32 %v623, %v626
      %vm628 = vweird.f32 %v602
      %vm629 = vweird.f32 %v623
      %vm630 = vmor %vm628, %vm629
      %v631 = vsel %vm630, %v623, %v627
      %v632 = vand.u32 2147483647, %v602
      %vm633 = vcmp.eq.f32.partialorder %v632, 8.507059e+37
      %v634 = vand.u32 %v602, 2147483648
      %v635 = vor.u32 1.1754944e-38, %v634
      %v636 = vsel %vm633, %v635, %v631
      %v637 = vmul.f32 1.0, %v636
      %v638 = vrcp.pop %v603
      %v639 = vmul.f32 %v603, %v638
      %v640 = vsub.f32 1.0, %v639
      %v641 = vmul.f32 %v638, %v640
      %v642 = vadd.f32 %v638, %v641
      %vm643 = vweird.f32 %v603
      %vm644 = vweird.f32 %v638
      %vm645 = vmor %vm643, %vm644
      %v646 = vsel %vm645, %v638, %v642
      %v647 = vand.u32 2147483647, %v603
      %vm648 = vcmp.eq.f32.partialorder %v647, 8.507059e+37
      %v649 = vand.u32 %v603, 2147483648
      %v650 = vor.u32 1.1754944e-38, %v649
      %v651 = vsel %vm648, %v650, %v646
      %v652 = vmul.f32 1.0, %v651
      %v653 = vrcp.pop %v604
      %v654 = vmul.f32 %v604, %v653
      %v655 = vsub.f32 1.0, %v654
      %v656 = vmul.f32 %v653, %v655
      %v657 = vadd.f32 %v653, %v656
      %vm658 = vweird.f32 %v604
      %vm659 = vweird.f32 %v653
      %vm660 = vmor %vm658, %vm659
      %v661 = vsel %vm660, %v653, %v657
      %v662 = vand.u32 2147483647, %v604
      %vm663 = vcmp.eq.f32.partialorder %v662, 8.507059e+37
      %v664 = vand.u32 %v604, 2147483648
      %v665 = vor.u32 1.1754944e-38, %v664
      %v666 = vsel %vm663, %v665, %v661
      %v667 = vmul.f32 1.0, %v666
      %v668 = vrcp.pop %v605
      %v669 = vmul.f32 %v605, %v668
      %v670 = vsub.f32 1.0, %v669
      %v671 = vmul.f32 %v668, %v670
      %v672 = vadd.f32 %v668, %v671
      %vm673 = vweird.f32 %v605
      %vm674 = vweird.f32 %v668
      %vm675 = vmor %vm673, %vm674
      %v676 = vsel %vm675, %v668, %v672
      %v677 = vand.u32 2147483647, %v605
      %vm678 = vcmp.eq.f32.partialorder %v677, 8.507059e+37
      %v679 = vand.u32 %v605, 2147483648
      %v680 = vor.u32 1.1754944e-38, %v679
      %v681 = vsel %vm678, %v680, %v676
      %v682 = vmul.f32 1.0, %v681
      %v683 = vrcp.pop %v606
      %v684 = vmul.f32 %v606, %v683
      %v685 = vsub.f32 1.0, %v684
      %v686 = vmul.f32 %v683, %v685
      %v687 = vadd.f32 %v683, %v686
      %vm688 = vweird.f32 %v606
      %vm689 = vweird.f32 %v683
      %vm690 = vmor %vm688, %vm689
      %v691 = vsel %vm690, %v683, %v687
      %v692 = vand.u32 2147483647, %v606
      %vm693 = vcmp.eq.f32.partialorder %v692, 8.507059e+37
      %v694 = vand.u32 %v606, 2147483648
      %v695 = vor.u32 1.1754944e-38, %v694
      %v696 = vsel %vm693, %v695, %v691
      %v697 = vmul.f32 1.0, %v696
      %v698 = vrcp.pop %v607
      %v699 = vmul.f32 %v607, %v698
      %v700 = vsub.f32 1.0, %v699
      %v701 = vmul.f32 %v698, %v700
      %v702 = vadd.f32 %v698, %v701
      %vm703 = vweird.f32 %v607
      %vm704 = vweird.f32 %v698
      %vm705 = vmor %vm703, %vm704
      %v706 = vsel %vm705, %v698, %v702
      %v707 = vand.u32 2147483647, %v607
      %vm708 = vcmp.eq.f32.partialorder %v707, 8.507059e+37
      %v709 = vand.u32 %v607, 2147483648
      %v710 = vor.u32 1.1754944e-38, %v709
      %v711 = vsel %vm708, %v710, %v706
      %v712 = vmul.f32 1.0, %v711
      %v713 = vmul.f32 %v560, %v622
      %v714 = vmul.f32 %v563, %v637
      %v715 = vmul.f32 %v566, %v652
      %v716 = vmul.f32 %v569, %v667
      %v717 = vmul.f32 %v572, %v682
      %v718 = vmul.f32 %v575, %v697
      %v719 = vmul.f32 %v578, %v712
      %s720 = scalar_lea.vmem [#allocation9], 128
      %v721 = vld [vmem:[%s720] sm:$0xff]
      %v722 = vld [vmem:[%s720 + $0x8] sm:$0xff]
      %v723 = vld [vmem:[%s720 + $0x10] sm:$0xff]
      %v724 = vld [vmem:[%s720 + $0x18] sm:$0xff]
      %v725 = vld [vmem:[%s720 + $0x20] sm:$0xff]
      %v726 = vld [vmem:[%s720 + $0x28] sm:$0xff]
      %v727 = vld [vmem:[%s720 + $0x30] sm:$0xff]
      %v728 = vld [vmem:[%s720 + $0x38] sm:$0xff]
      %v729 = vld [vmem:[%s720 + $0x40] sm:$0xff]
      %v730 = vld [vmem:[%s720 + $0x48] sm:$0xff]
      %v731 = vld [vmem:[%s720 + $0x50] sm:$0xff]
      %v732 = vld [vmem:[%s720 + $0x58] sm:$0xff]
      %v733 = vld [vmem:[%s720 + $0x60] sm:$0xff]
      %v734 = vld [vmem:[%s720 + $0x68] sm:$0xff]
      %v735 = vld [vmem:[%s720 + $0x70] sm:$0xff]
      %v736 = vld [vmem:[%s720 + $0x78] sm:$0xff]
      %s737 = scalar_lea.vmem [#allocation11], 1
      %v738 = vld [vmem:[%s737] sm:$0x1]
      %v740 = vperm.slane %v738, 0
      %742 = vmatpush.msra.mxu0 %v736
      %743 = vmatpush.msra.mxu0 %v735
      %744 = vmatpush.msra.mxu0 %v734
      %745 = vmatpush.msra.mxu0 %v733
      %746 = vmatpush.msra.mxu0 %v732
      %747 = vmatpush.msra.mxu0 %v731
      %748 = vmatpush.msra.mxu0 %v730
      %749 = vmatpush.msra.mxu0 %v729
      %750 = vmatpush.msra.mxu0 %v728
      %751 = vmatpush.msra.mxu0 %v727
      %752 = vmatpush.msra.mxu0 %v726
      %753 = vmatpush.msra.mxu0 %v725
      %754 = vmatpush.msra.mxu0 %v724
      %755 = vmatpush.msra.mxu0 %v723
      %756 = vmatpush.msra.mxu0 %v722
      %757 = vmatpush.msra.mxu0 %v721
      %758 = vmatmul.f32.gmra.mxu0 %v713
      %v759 = vpop.f32.mrf.mxu0
      %v760 = vadd.f32 %v740, %v759
      %761 = vmatmul.f32.gmra.mxu0 %v714
      %v762 = vpop.f32.mrf.mxu0
      %v763 = vadd.f32 %v740, %v762
      %764 = vmatmul.f32.gmra.mxu0 %v715
      %v765 = vpop.f32.mrf.mxu0
      %v766 = vadd.f32 %v740, %v765
      %767 = vmatmul.f32.gmra.mxu0 %v716
      %v768 = vpop.f32.mrf.mxu0
      %v769 = vadd.f32 %v740, %v768
      %770 = vmatmul.f32.gmra.mxu0 %v717
      %v771 = vpop.f32.mrf.mxu0
      %v772 = vadd.f32 %v740, %v771
      %773 = vmatmul.f32.gmra.mxu0 %v718
      %v774 = vpop.f32.mrf.mxu0
      %v775 = vadd.f32 %v740, %v774
      %776 = vmatmul.f32.gmra.mxu0 %v719
      %v777 = vpop.f32.mrf.mxu0
      %v778 = vadd.f32 %v740, %v777
      %779 = vdwg.mxu0
      %v780 = vxor.u32 %v760, 2147483648
      %v781 = vxor.u32 %v763, 2147483648
      %v782 = vxor.u32 %v766, 2147483648
      %v783 = vxor.u32 %v769, 2147483648
      %v784 = vxor.u32 %v772, 2147483648
      %v785 = vxor.u32 %v775, 2147483648
      %v786 = vxor.u32 %v778, 2147483648
      %v787 = vmul.f32 %v780, 1.442695
      %v788 = vpow.pop %v787
      %v789 = vmul.f32 %v781, 1.442695
      %v790 = vpow.pop %v789
      %v791 = vmul.f32 %v782, 1.442695
      %v792 = vpow.pop %v791
      %v793 = vmul.f32 %v783, 1.442695
      %v794 = vpow.pop %v793
      %v795 = vmul.f32 %v784, 1.442695
      %v796 = vpow.pop %v795
      %v797 = vmul.f32 %v785, 1.442695
      %v798 = vpow.pop %v797
      %v799 = vmul.f32 %v786, 1.442695
      %v800 = vpow.pop %v799
      %v801 = vadd.f32 %v788, 1.0
      %v802 = vadd.f32 %v790, 1.0
      %v803 = vadd.f32 %v792, 1.0
      %v804 = vadd.f32 %v794, 1.0
      %v805 = vadd.f32 %v796, 1.0
      %v806 = vadd.f32 %v798, 1.0
      %v807 = vadd.f32 %v800, 1.0
      %v808 = vrcp.pop %v801
      %v809 = vmul.f32 %v801, %v808
      %v810 = vsub.f32 1.0, %v809
      %v811 = vmul.f32 %v808, %v810
      %v812 = vadd.f32 %v808, %v811
      %vm813 = vweird.f32 %v801
      %vm814 = vweird.f32 %v808
      %vm815 = vmor %vm813, %vm814
      %v816 = vsel %vm815, %v808, %v812
      %v817 = vand.u32 2147483647, %v801
      %vm818 = vcmp.eq.f32.partialorder %v817, 8.507059e+37
      %v819 = vand.u32 %v801, 2147483648
      %v820 = vor.u32 1.1754944e-38, %v819
      %v821 = vsel %vm818, %v820, %v816
      %v822 = vmul.f32 1.0, %v821
      %v823 = vrcp.pop %v802
      %v824 = vmul.f32 %v802, %v823
      %v825 = vsub.f32 1.0, %v824
      %v826 = vmul.f32 %v823, %v825
      %v827 = vadd.f32 %v823, %v826
      %vm828 = vweird.f32 %v802
      %vm829 = vweird.f32 %v823
      %vm830 = vmor %vm828, %vm829
      %v831 = vsel %vm830, %v823, %v827
      %v832 = vand.u32 2147483647, %v802
      %vm833 = vcmp.eq.f32.partialorder %v832, 8.507059e+37
      %v834 = vand.u32 %v802, 2147483648
      %v835 = vor.u32 1.1754944e-38, %v834
      %v836 = vsel %vm833, %v835, %v831
      %v837 = vmul.f32 1.0, %v836
      %v838 = vrcp.pop %v803
      %v839 = vmul.f32 %v803, %v838
      %v840 = vsub.f32 1.0, %v839
      %v841 = vmul.f32 %v838, %v840
      %v842 = vadd.f32 %v838, %v841
      %vm843 = vweird.f32 %v803
      %vm844 = vweird.f32 %v838
      %vm845 = vmor %vm843, %vm844
      %v846 = vsel %vm845, %v838, %v842
      %v847 = vand.u32 2147483647, %v803
      %vm848 = vcmp.eq.f32.partialorder %v847, 8.507059e+37
      %v849 = vand.u32 %v803, 2147483648
      %v850 = vor.u32 1.1754944e-38, %v849
      %v851 = vsel %vm848, %v850, %v846
      %v852 = vmul.f32 1.0, %v851
      %v853 = vrcp.pop %v804
      %v854 = vmul.f32 %v804, %v853
      %v855 = vsub.f32 1.0, %v854
      %v856 = vmul.f32 %v853, %v855
      %v857 = vadd.f32 %v853, %v856
      %vm858 = vweird.f32 %v804
      %vm859 = vweird.f32 %v853
      %vm860 = vmor %vm858, %vm859
      %v861 = vsel %vm860, %v853, %v857
      %v862 = vand.u32 2147483647, %v804
      %vm863 = vcmp.eq.f32.partialorder %v862, 8.507059e+37
      %v864 = vand.u32 %v804, 2147483648
      %v865 = vor.u32 1.1754944e-38, %v864
      %v866 = vsel %vm863, %v865, %v861
      %v867 = vmul.f32 1.0, %v866
      %v868 = vrcp.pop %v805
      %v869 = vmul.f32 %v805, %v868
      %v870 = vsub.f32 1.0, %v869
      %v871 = vmul.f32 %v868, %v870
      %v872 = vadd.f32 %v868, %v871
      %vm873 = vweird.f32 %v805
      %vm874 = vweird.f32 %v868
      %vm875 = vmor %vm873, %vm874
      %v876 = vsel %vm875, %v868, %v872
      %v877 = vand.u32 2147483647, %v805
      %vm878 = vcmp.eq.f32.partialorder %v877, 8.507059e+37
      %v879 = vand.u32 %v805, 2147483648
      %v880 = vor.u32 1.1754944e-38, %v879
      %v881 = vsel %vm878, %v880, %v876
      %v882 = vmul.f32 1.0, %v881
      %v883 = vrcp.pop %v806
      %v884 = vmul.f32 %v806, %v883
      %v885 = vsub.f32 1.0, %v884
      %v886 = vmul.f32 %v883, %v885
      %v887 = vadd.f32 %v883, %v886
      %vm888 = vweird.f32 %v806
      %vm889 = vweird.f32 %v883
      %vm890 = vmor %vm888, %vm889
      %v891 = vsel %vm890, %v883, %v887
      %v892 = vand.u32 2147483647, %v806
      %vm893 = vcmp.eq.f32.partialorder %v892, 8.507059e+37
      %v894 = vand.u32 %v806, 2147483648
      %v895 = vor.u32 1.1754944e-38, %v894
      %v896 = vsel %vm893, %v895, %v891
      %v897 = vmul.f32 1.0, %v896
      %v898 = vrcp.pop %v807
      %v899 = vmul.f32 %v807, %v898
      %v900 = vsub.f32 1.0, %v899
      %v901 = vmul.f32 %v898, %v900
      %v902 = vadd.f32 %v898, %v901
      %vm903 = vweird.f32 %v807
      %vm904 = vweird.f32 %v898
      %vm905 = vmor %vm903, %vm904
      %v906 = vsel %vm905, %v898, %v902
      %v907 = vand.u32 2147483647, %v807
      %vm908 = vcmp.eq.f32.partialorder %v907, 8.507059e+37
      %v909 = vand.u32 %v807, 2147483648
      %v910 = vor.u32 1.1754944e-38, %v909
      %v911 = vsel %vm908, %v910, %v906
      %v912 = vmul.f32 1.0, %v911
      %v913 = vmul.f32 %v760, %v822
      %v914 = vmul.f32 %v763, %v837
      %v915 = vmul.f32 %v766, %v852
      %v916 = vmul.f32 %v769, %v867
      %v917 = vmul.f32 %v772, %v882
      %v918 = vmul.f32 %v775, %v897
      %v919 = vmul.f32 %v778, %v912
      %s920 = scalar_lea.vmem [#allocation9], 256
      %v921 = vld [vmem:[%s920] sm:$0xff]
      %v922 = vld [vmem:[%s920 + $0x8] sm:$0xff]
      %v923 = vld [vmem:[%s920 + $0x10] sm:$0xff]
      %v924 = vld [vmem:[%s920 + $0x18] sm:$0xff]
      %v925 = vld [vmem:[%s920 + $0x20] sm:$0xff]
      %v926 = vld [vmem:[%s920 + $0x28] sm:$0xff]
      %v927 = vld [vmem:[%s920 + $0x30] sm:$0xff]
      %v928 = vld [vmem:[%s920 + $0x38] sm:$0xff]
      %v929 = vld [vmem:[%s920 + $0x40] sm:$0xff]
      %v930 = vld [vmem:[%s920 + $0x48] sm:$0xff]
      %v931 = vld [vmem:[%s920 + $0x50] sm:$0xff]
      %v932 = vld [vmem:[%s920 + $0x58] sm:$0xff]
      %v933 = vld [vmem:[%s920 + $0x60] sm:$0xff]
      %v934 = vld [vmem:[%s920 + $0x68] sm:$0xff]
      %v935 = vld [vmem:[%s920 + $0x70] sm:$0xff]
      %v936 = vld [vmem:[%s920 + $0x78] sm:$0xff]
      %s937 = scalar_lea.vmem [#allocation11], 2
      %v938 = vld [vmem:[%s937] sm:$0x1]
      %v940 = vperm.slane %v938, 0
      %942 = vmatpush.msra.mxu0 %v936
      %943 = vmatpush.msra.mxu0 %v935
      %944 = vmatpush.msra.mxu0 %v934
      %945 = vmatpush.msra.mxu0 %v933
      %946 = vmatpush.msra.mxu0 %v932
      %947 = vmatpush.msra.mxu0 %v931
      %948 = vmatpush.msra.mxu0 %v930
      %949 = vmatpush.msra.mxu0 %v929
      %950 = vmatpush.msra.mxu0 %v928
      %951 = vmatpush.msra.mxu0 %v927
      %952 = vmatpush.msra.mxu0 %v926
      %953 = vmatpush.msra.mxu0 %v925
      %954 = vmatpush.msra.mxu0 %v924
      %955 = vmatpush.msra.mxu0 %v923
      %956 = vmatpush.msra.mxu0 %v922
      %957 = vmatpush.msra.mxu0 %v921
      %958 = vmatmul.f32.gmra.mxu0 %v913
      %v959 = vpop.f32.mrf.mxu0
      %v960 = vadd.f32 %v940, %v959
      %961 = vmatmul.f32.gmra.mxu0 %v914
      %v962 = vpop.f32.mrf.mxu0
      %v963 = vadd.f32 %v940, %v962
      %964 = vmatmul.f32.gmra.mxu0 %v915
      %v965 = vpop.f32.mrf.mxu0
      %v966 = vadd.f32 %v940, %v965
      %967 = vmatmul.f32.gmra.mxu0 %v916
      %v968 = vpop.f32.mrf.mxu0
      %v969 = vadd.f32 %v940, %v968
      %970 = vmatmul.f32.gmra.mxu0 %v917
      %v971 = vpop.f32.mrf.mxu0
      %v972 = vadd.f32 %v940, %v971
      %973 = vmatmul.f32.gmra.mxu0 %v918
      %v974 = vpop.f32.mrf.mxu0
      %v975 = vadd.f32 %v940, %v974
      %976 = vmatmul.f32.gmra.mxu0 %v919
      %v977 = vpop.f32.mrf.mxu0
      %v978 = vadd.f32 %v940, %v977
      %979 = vdwg.mxu0
      %v980 = vxor.u32 %v960, 2147483648
      %v981 = vxor.u32 %v963, 2147483648
      %v982 = vxor.u32 %v966, 2147483648
      %v983 = vxor.u32 %v969, 2147483648
      %v984 = vxor.u32 %v972, 2147483648
      %v985 = vxor.u32 %v975, 2147483648
      %v986 = vxor.u32 %v978, 2147483648
      %v987 = vmul.f32 %v980, 1.442695
      %v988 = vpow.pop %v987
      %v989 = vmul.f32 %v981, 1.442695
      %v990 = vpow.pop %v989
      %v991 = vmul.f32 %v982, 1.442695
      %v992 = vpow.pop %v991
      %v993 = vmul.f32 %v983, 1.442695
      %v994 = vpow.pop %v993
      %v995 = vmul.f32 %v984, 1.442695
      %v996 = vpow.pop %v995
      %v997 = vmul.f32 %v985, 1.442695
      %v998 = vpow.pop %v997
      %v999 = vmul.f32 %v986, 1.442695
      %v1000 = vpow.pop %v999
      %v1001 = vadd.f32 %v988, 1.0
      %v1002 = vadd.f32 %v990, 1.0
      %v1003 = vadd.f32 %v992, 1.0
      %v1004 = vadd.f32 %v994, 1.0
      %v1005 = vadd.f32 %v996, 1.0
      %v1006 = vadd.f32 %v998, 1.0
      %v1007 = vadd.f32 %v1000, 1.0
      %v1008 = vrcp.pop %v1001
      %v1009 = vmul.f32 %v1001, %v1008
      %v1010 = vsub.f32 1.0, %v1009
      %v1011 = vmul.f32 %v1008, %v1010
      %v1012 = vadd.f32 %v1008, %v1011
      %vm1013 = vweird.f32 %v1001
      %vm1014 = vweird.f32 %v1008
      %vm1015 = vmor %vm1013, %vm1014
      %v1016 = vsel %vm1015, %v1008, %v1012
      %v1017 = vand.u32 2147483647, %v1001
      %vm1018 = vcmp.eq.f32.partialorder %v1017, 8.507059e+37
      %v1019 = vand.u32 %v1001, 2147483648
      %v1020 = vor.u32 1.1754944e-38, %v1019
      %v1021 = vsel %vm1018, %v1020, %v1016
      %v1022 = vmul.f32 1.0, %v1021
      %v1023 = vrcp.pop %v1002
      %v1024 = vmul.f32 %v1002, %v1023
      %v1025 = vsub.f32 1.0, %v1024
      %v1026 = vmul.f32 %v1023, %v1025
      %v1027 = vadd.f32 %v1023, %v1026
      %vm1028 = vweird.f32 %v1002
      %vm1029 = vweird.f32 %v1023
      %vm1030 = vmor %vm1028, %vm1029
      %v1031 = vsel %vm1030, %v1023, %v1027
      %v1032 = vand.u32 2147483647, %v1002
      %vm1033 = vcmp.eq.f32.partialorder %v1032, 8.507059e+37
      %v1034 = vand.u32 %v1002, 2147483648
      %v1035 = vor.u32 1.1754944e-38, %v1034
      %v1036 = vsel %vm1033, %v1035, %v1031
      %v1037 = vmul.f32 1.0, %v1036
      %v1038 = vrcp.pop %v1003
      %v1039 = vmul.f32 %v1003, %v1038
      %v1040 = vsub.f32 1.0, %v1039
      %v1041 = vmul.f32 %v1038, %v1040
      %v1042 = vadd.f32 %v1038, %v1041
      %vm1043 = vweird.f32 %v1003
      %vm1044 = vweird.f32 %v1038
      %vm1045 = vmor %vm1043, %vm1044
      %v1046 = vsel %vm1045, %v1038, %v1042
      %v1047 = vand.u32 2147483647, %v1003
      %vm1048 = vcmp.eq.f32.partialorder %v1047, 8.507059e+37
      %v1049 = vand.u32 %v1003, 2147483648
      %v1050 = vor.u32 1.1754944e-38, %v1049
      %v1051 = vsel %vm1048, %v1050, %v1046
      %v1052 = vmul.f32 1.0, %v1051
      %v1053 = vrcp.pop %v1004
      %v1054 = vmul.f32 %v1004, %v1053
      %v1055 = vsub.f32 1.0, %v1054
      %v1056 = vmul.f32 %v1053, %v1055
      %v1057 = vadd.f32 %v1053, %v1056
      %vm1058 = vweird.f32 %v1004
      %vm1059 = vweird.f32 %v1053
      %vm1060 = vmor %vm1058, %vm1059
      %v1061 = vsel %vm1060, %v1053, %v1057
      %v1062 = vand.u32 2147483647, %v1004
      %vm1063 = vcmp.eq.f32.partialorder %v1062, 8.507059e+37
      %v1064 = vand.u32 %v1004, 2147483648
      %v1065 = vor.u32 1.1754944e-38, %v1064
      %v1066 = vsel %vm1063, %v1065, %v1061
      %v1067 = vmul.f32 1.0, %v1066
      %v1068 = vrcp.pop %v1005
      %v1069 = vmul.f32 %v1005, %v1068
      %v1070 = vsub.f32 1.0, %v1069
      %v1071 = vmul.f32 %v1068, %v1070
      %v1072 = vadd.f32 %v1068, %v1071
      %vm1073 = vweird.f32 %v1005
      %vm1074 = vweird.f32 %v1068
      %vm1075 = vmor %vm1073, %vm1074
      %v1076 = vsel %vm1075, %v1068, %v1072
      %v1077 = vand.u32 2147483647, %v1005
      %vm1078 = vcmp.eq.f32.partialorder %v1077, 8.507059e+37
      %v1079 = vand.u32 %v1005, 2147483648
      %v1080 = vor.u32 1.1754944e-38, %v1079
      %v1081 = vsel %vm1078, %v1080, %v1076
      %v1082 = vmul.f32 1.0, %v1081
      %v1083 = vrcp.pop %v1006
      %v1084 = vmul.f32 %v1006, %v1083
      %v1085 = vsub.f32 1.0, %v1084
      %v1086 = vmul.f32 %v1083, %v1085
      %v1087 = vadd.f32 %v1083, %v1086
      %vm1088 = vweird.f32 %v1006
      %vm1089 = vweird.f32 %v1083
      %vm1090 = vmor %vm1088, %vm1089
      %v1091 = vsel %vm1090, %v1083, %v1087
      %v1092 = vand.u32 2147483647, %v1006
      %vm1093 = vcmp.eq.f32.partialorder %v1092, 8.507059e+37
      %v1094 = vand.u32 %v1006, 2147483648
      %v1095 = vor.u32 1.1754944e-38, %v1094
      %v1096 = vsel %vm1093, %v1095, %v1091
      %v1097 = vmul.f32 1.0, %v1096
      %v1098 = vrcp.pop %v1007
      %v1099 = vmul.f32 %v1007, %v1098
      %v1100 = vsub.f32 1.0, %v1099
      %v1101 = vmul.f32 %v1098, %v1100
      %v1102 = vadd.f32 %v1098, %v1101
      %vm1103 = vweird.f32 %v1007
      %vm1104 = vweird.f32 %v1098
      %vm1105 = vmor %vm1103, %vm1104
      %v1106 = vsel %vm1105, %v1098, %v1102
      %v1107 = vand.u32 2147483647, %v1007
      %vm1108 = vcmp.eq.f32.partialorder %v1107, 8.507059e+37
      %v1109 = vand.u32 %v1007, 2147483648
      %v1110 = vor.u32 1.1754944e-38, %v1109
      %v1111 = vsel %vm1108, %v1110, %v1106
      %v1112 = vmul.f32 1.0, %v1111
      %v1113 = vmul.f32 %v960, %v1022
      %v1114 = vmul.f32 %v963, %v1037
      %v1115 = vmul.f32 %v966, %v1052
      %v1116 = vmul.f32 %v969, %v1067
      %v1117 = vmul.f32 %v972, %v1082
      %v1118 = vmul.f32 %v975, %v1097
      %v1119 = vmul.f32 %v978, %v1112
      %s1120 = scalar_lea.vmem [#allocation9], 384
      %v1121 = vld [vmem:[%s1120] sm:$0xff]
      %v1122 = vld [vmem:[%s1120 + $0x8] sm:$0xff]
      %v1123 = vld [vmem:[%s1120 + $0x10] sm:$0xff]
      %v1124 = vld [vmem:[%s1120 + $0x18] sm:$0xff]
      %v1125 = vld [vmem:[%s1120 + $0x20] sm:$0xff]
      %v1126 = vld [vmem:[%s1120 + $0x28] sm:$0xff]
      %v1127 = vld [vmem:[%s1120 + $0x30] sm:$0xff]
      %v1128 = vld [vmem:[%s1120 + $0x38] sm:$0xff]
      %v1129 = vld [vmem:[%s1120 + $0x40] sm:$0xff]
      %v1130 = vld [vmem:[%s1120 + $0x48] sm:$0xff]
      %v1131 = vld [vmem:[%s1120 + $0x50] sm:$0xff]
      %v1132 = vld [vmem:[%s1120 + $0x58] sm:$0xff]
      %v1133 = vld [vmem:[%s1120 + $0x60] sm:$0xff]
      %v1134 = vld [vmem:[%s1120 + $0x68] sm:$0xff]
      %v1135 = vld [vmem:[%s1120 + $0x70] sm:$0xff]
      %v1136 = vld [vmem:[%s1120 + $0x78] sm:$0xff]
      %s1137 = scalar_lea.vmem [#allocation11], 3
      %v1138 = vld [vmem:[%s1137] sm:$0x1]
      %v1140 = vperm.slane %v1138, 0
      %1142 = vmatpush.msra.mxu0 %v1136
      %1143 = vmatpush.msra.mxu0 %v1135
      %1144 = vmatpush.msra.mxu0 %v1134
      %1145 = vmatpush.msra.mxu0 %v1133
      %1146 = vmatpush.msra.mxu0 %v1132
      %1147 = vmatpush.msra.mxu0 %v1131
      %1148 = vmatpush.msra.mxu0 %v1130
      %1149 = vmatpush.msra.mxu0 %v1129
      %1150 = vmatpush.msra.mxu0 %v1128
      %1151 = vmatpush.msra.mxu0 %v1127
      %1152 = vmatpush.msra.mxu0 %v1126
      %1153 = vmatpush.msra.mxu0 %v1125
      %1154 = vmatpush.msra.mxu0 %v1124
      %1155 = vmatpush.msra.mxu0 %v1123
      %1156 = vmatpush.msra.mxu0 %v1122
      %1157 = vmatpush.msra.mxu0 %v1121
      %1158 = vmatmul.f32.gmra.mxu0 %v502
      %v1159 = vpop.f32.mrf.mxu0
      %v1160 = vadd.f32 %v1140, %v1159
      %1161 = vmatmul.f32.gmra.mxu0 %v505
      %v1162 = vpop.f32.mrf.mxu0
      %v1163 = vadd.f32 %v1140, %v1162
      %1164 = vmatmul.f32.gmra.mxu0 %v508
      %v1165 = vpop.f32.mrf.mxu0
      %v1166 = vadd.f32 %v1140, %v1165
      %1167 = vmatmul.f32.gmra.mxu0 %v511
      %v1168 = vpop.f32.mrf.mxu0
      %v1169 = vadd.f32 %v1140, %v1168
      %1170 = vmatmul.f32.gmra.mxu0 %v514
      %v1171 = vpop.f32.mrf.mxu0
      %v1172 = vadd.f32 %v1140, %v1171
      %1173 = vmatmul.f32.gmra.mxu0 %v517
      %v1174 = vpop.f32.mrf.mxu0
      %v1175 = vadd.f32 %v1140, %v1174
      %1176 = vmatmul.f32.gmra.mxu0 %v520
      %v1177 = vpop.f32.mrf.mxu0
      %v1178 = vadd.f32 %v1140, %v1177
      %1179 = vdwg.mxu0
      %v1180 = vxor.u32 %v1160, 2147483648
      %v1181 = vxor.u32 %v1163, 2147483648
      %v1182 = vxor.u32 %v1166, 2147483648
      %v1183 = vxor.u32 %v1169, 2147483648
      %v1184 = vxor.u32 %v1172, 2147483648
      %v1185 = vxor.u32 %v1175, 2147483648
      %v1186 = vxor.u32 %v1178, 2147483648
      %v1187 = vmul.f32 %v1180, 1.442695
      %v1188 = vpow.pop %v1187
      %v1189 = vmul.f32 %v1181, 1.442695
      %v1190 = vpow.pop %v1189
      %v1191 = vmul.f32 %v1182, 1.442695
      %v1192 = vpow.pop %v1191
      %v1193 = vmul.f32 %v1183, 1.442695
      %v1194 = vpow.pop %v1193
      %v1195 = vmul.f32 %v1184, 1.442695
      %v1196 = vpow.pop %v1195
      %v1197 = vmul.f32 %v1185, 1.442695
      %v1198 = vpow.pop %v1197
      %v1199 = vmul.f32 %v1186, 1.442695
      %v1200 = vpow.pop %v1199
      %v1201 = vadd.f32 %v1188, 1.0
      %v1202 = vadd.f32 %v1190, 1.0
      %v1203 = vadd.f32 %v1192, 1.0
      %v1204 = vadd.f32 %v1194, 1.0
      %v1205 = vadd.f32 %v1196, 1.0
      %v1206 = vadd.f32 %v1198, 1.0
      %v1207 = vadd.f32 %v1200, 1.0
      %v1208 = vrcp.pop %v1201
      %v1209 = vmul.f32 %v1201, %v1208
      %v1210 = vsub.f32 1.0, %v1209
      %v1211 = vmul.f32 %v1208, %v1210
      %v1212 = vadd.f32 %v1208, %v1211
      %vm1213 = vweird.f32 %v1201
      %vm1214 = vweird.f32 %v1208
      %vm1215 = vmor %vm1213, %vm1214
      %v1216 = vsel %vm1215, %v1208, %v1212
      %v1217 = vand.u32 2147483647, %v1201
      %vm1218 = vcmp.eq.f32.partialorder %v1217, 8.507059e+37
      %v1219 = vand.u32 %v1201, 2147483648
      %v1220 = vor.u32 1.1754944e-38, %v1219
      %v1221 = vsel %vm1218, %v1220, %v1216
      %v1222 = vmul.f32 1.0, %v1221
      %v1223 = vrcp.pop %v1202
      %v1224 = vmul.f32 %v1202, %v1223
      %v1225 = vsub.f32 1.0, %v1224
      %v1226 = vmul.f32 %v1223, %v1225
      %v1227 = vadd.f32 %v1223, %v1226
      %vm1228 = vweird.f32 %v1202
      %vm1229 = vweird.f32 %v1223
      %vm1230 = vmor %vm1228, %vm1229
      %v1231 = vsel %vm1230, %v1223, %v1227
      %v1232 = vand.u32 2147483647, %v1202
      %vm1233 = vcmp.eq.f32.partialorder %v1232, 8.507059e+37
      %v1234 = vand.u32 %v1202, 2147483648
      %v1235 = vor.u32 1.1754944e-38, %v1234
      %v1236 = vsel %vm1233, %v1235, %v1231
      %v1237 = vmul.f32 1.0, %v1236
      %v1238 = vrcp.pop %v1203
      %v1239 = vmul.f32 %v1203, %v1238
      %v1240 = vsub.f32 1.0, %v1239
      %v1241 = vmul.f32 %v1238, %v1240
      %v1242 = vadd.f32 %v1238, %v1241
      %vm1243 = vweird.f32 %v1203
      %vm1244 = vweird.f32 %v1238
      %vm1245 = vmor %vm1243, %vm1244
      %v1246 = vsel %vm1245, %v1238, %v1242
      %v1247 = vand.u32 2147483647, %v1203
      %vm1248 = vcmp.eq.f32.partialorder %v1247, 8.507059e+37
      %v1249 = vand.u32 %v1203, 2147483648
      %v1250 = vor.u32 1.1754944e-38, %v1249
      %v1251 = vsel %vm1248, %v1250, %v1246
      %v1252 = vmul.f32 1.0, %v1251
      %v1253 = vrcp.pop %v1204
      %v1254 = vmul.f32 %v1204, %v1253
      %v1255 = vsub.f32 1.0, %v1254
      %v1256 = vmul.f32 %v1253, %v1255
      %v1257 = vadd.f32 %v1253, %v1256
      %vm1258 = vweird.f32 %v1204
      %vm1259 = vweird.f32 %v1253
      %vm1260 = vmor %vm1258, %vm1259
      %v1261 = vsel %vm1260, %v1253, %v1257
      %v1262 = vand.u32 2147483647, %v1204
      %vm1263 = vcmp.eq.f32.partialorder %v1262, 8.507059e+37
      %v1264 = vand.u32 %v1204, 2147483648
      %v1265 = vor.u32 1.1754944e-38, %v1264
      %v1266 = vsel %vm1263, %v1265, %v1261
      %v1267 = vmul.f32 1.0, %v1266
      %v1268 = vrcp.pop %v1205
      %v1269 = vmul.f32 %v1205, %v1268
      %v1270 = vsub.f32 1.0, %v1269
      %v1271 = vmul.f32 %v1268, %v1270
      %v1272 = vadd.f32 %v1268, %v1271
      %vm1273 = vweird.f32 %v1205
      %vm1274 = vweird.f32 %v1268
      %vm1275 = vmor %vm1273, %vm1274
      %v1276 = vsel %vm1275, %v1268, %v1272
      %v1277 = vand.u32 2147483647, %v1205
      %vm1278 = vcmp.eq.f32.partialorder %v1277, 8.507059e+37
      %v1279 = vand.u32 %v1205, 2147483648
      %v1280 = vor.u32 1.1754944e-38, %v1279
      %v1281 = vsel %vm1278, %v1280, %v1276
      %v1282 = vmul.f32 1.0, %v1281
      %v1283 = vrcp.pop %v1206
      %v1284 = vmul.f32 %v1206, %v1283
      %v1285 = vsub.f32 1.0, %v1284
      %v1286 = vmul.f32 %v1283, %v1285
      %v1287 = vadd.f32 %v1283, %v1286
      %vm1288 = vweird.f32 %v1206
      %vm1289 = vweird.f32 %v1283
      %vm1290 = vmor %vm1288, %vm1289
      %v1291 = vsel %vm1290, %v1283, %v1287
      %v1292 = vand.u32 2147483647, %v1206
      %vm1293 = vcmp.eq.f32.partialorder %v1292, 8.507059e+37
      %v1294 = vand.u32 %v1206, 2147483648
      %v1295 = vor.u32 1.1754944e-38, %v1294
      %v1296 = vsel %vm1293, %v1295, %v1291
      %v1297 = vmul.f32 1.0, %v1296
      %v1298 = vrcp.pop %v1207
      %v1299 = vmul.f32 %v1207, %v1298
      %v1300 = vsub.f32 1.0, %v1299
      %v1301 = vmul.f32 %v1298, %v1300
      %v1302 = vadd.f32 %v1298, %v1301
      %vm1303 = vweird.f32 %v1207
      %vm1304 = vweird.f32 %v1298
      %vm1305 = vmor %vm1303, %vm1304
      %v1306 = vsel %vm1305, %v1298, %v1302
      %v1307 = vand.u32 2147483647, %v1207
      %vm1308 = vcmp.eq.f32.partialorder %v1307, 8.507059e+37
      %v1309 = vand.u32 %v1207, 2147483648
      %v1310 = vor.u32 1.1754944e-38, %v1309
      %v1311 = vsel %vm1308, %v1310, %v1306
      %v1312 = vmul.f32 1.0, %v1311
      %v1313 = vmul.f32 %v1160, %v1222
      %v1314 = vmul.f32 %v1163, %v1237
      %v1315 = vmul.f32 %v1166, %v1252
      %v1316 = vmul.f32 %v1169, %v1267
      %v1317 = vmul.f32 %v1172, %v1282
      %v1318 = vmul.f32 %v1175, %v1297
      %v1319 = vmul.f32 %v1178, %v1312
      %s1320 = scalar_lea.vmem [#allocation9], 512
      %v1321 = vld [vmem:[%s1320] sm:$0xff]
      %v1322 = vld [vmem:[%s1320 + $0x8] sm:$0xff]
      %v1323 = vld [vmem:[%s1320 + $0x10] sm:$0xff]
      %v1324 = vld [vmem:[%s1320 + $0x18] sm:$0xff]
      %v1325 = vld [vmem:[%s1320 + $0x20] sm:$0xff]
      %v1326 = vld [vmem:[%s1320 + $0x28] sm:$0xff]
      %v1327 = vld [vmem:[%s1320 + $0x30] sm:$0xff]
      %v1328 = vld [vmem:[%s1320 + $0x38] sm:$0xff]
      %v1329 = vld [vmem:[%s1320 + $0x40] sm:$0xff]
      %v1330 = vld [vmem:[%s1320 + $0x48] sm:$0xff]
      %v1331 = vld [vmem:[%s1320 + $0x50] sm:$0xff]
      %v1332 = vld [vmem:[%s1320 + $0x58] sm:$0xff]
      %v1333 = vld [vmem:[%s1320 + $0x60] sm:$0xff]
      %v1334 = vld [vmem:[%s1320 + $0x68] sm:$0xff]
      %v1335 = vld [vmem:[%s1320 + $0x70] sm:$0xff]
      %v1336 = vld [vmem:[%s1320 + $0x78] sm:$0xff]
      %s1337 = scalar_lea.vmem [#allocation11], 4
      %v1338 = vld [vmem:[%s1337] sm:$0x1]
      %v1340 = vperm.slane %v1338, 0
      %1342 = vmatpush.msra.mxu0 %v1336
      %1343 = vmatpush.msra.mxu0 %v1335
      %1344 = vmatpush.msra.mxu0 %v1334
      %1345 = vmatpush.msra.mxu0 %v1333
      %1346 = vmatpush.msra.mxu0 %v1332
      %1347 = vmatpush.msra.mxu0 %v1331
      %1348 = vmatpush.msra.mxu0 %v1330
      %1349 = vmatpush.msra.mxu0 %v1329
      %1350 = vmatpush.msra.mxu0 %v1328
      %1351 = vmatpush.msra.mxu0 %v1327
      %1352 = vmatpush.msra.mxu0 %v1326
      %1353 = vmatpush.msra.mxu0 %v1325
      %1354 = vmatpush.msra.mxu0 %v1324
      %1355 = vmatpush.msra.mxu0 %v1323
      %1356 = vmatpush.msra.mxu0 %v1322
      %1357 = vmatpush.msra.mxu0 %v1321
      %1358 = vmatmul.f32.gmra.mxu0 %v1313
      %v1359 = vpop.f32.mrf.mxu0
      %v1360 = vadd.f32 %v1340, %v1359
      %1361 = vmatmul.f32.gmra.mxu0 %v1314
      %v1362 = vpop.f32.mrf.mxu0
      %v1363 = vadd.f32 %v1340, %v1362
      %1364 = vmatmul.f32.gmra.mxu0 %v1315
      %v1365 = vpop.f32.mrf.mxu0
      %v1366 = vadd.f32 %v1340, %v1365
      %1367 = vmatmul.f32.gmra.mxu0 %v1316
      %v1368 = vpop.f32.mrf.mxu0
      %v1369 = vadd.f32 %v1340, %v1368
      %1370 = vmatmul.f32.gmra.mxu0 %v1317
      %v1371 = vpop.f32.mrf.mxu0
      %v1372 = vadd.f32 %v1340, %v1371
      %1373 = vmatmul.f32.gmra.mxu0 %v1318
      %v1374 = vpop.f32.mrf.mxu0
      %v1375 = vadd.f32 %v1340, %v1374
      %1376 = vmatmul.f32.gmra.mxu0 %v1319
      %v1377 = vpop.f32.mrf.mxu0
      %v1378 = vadd.f32 %v1340, %v1377
      %1379 = vdwg.mxu0
      %v1380 = vxor.u32 %v1360, 2147483648
      %v1381 = vxor.u32 %v1363, 2147483648
      %v1382 = vxor.u32 %v1366, 2147483648
      %v1383 = vxor.u32 %v1369, 2147483648
      %v1384 = vxor.u32 %v1372, 2147483648
      %v1385 = vxor.u32 %v1375, 2147483648
      %v1386 = vxor.u32 %v1378, 2147483648
      %v1387 = vmul.f32 %v1380, 1.442695
      %v1388 = vpow.pop %v1387
      %v1389 = vmul.f32 %v1381, 1.442695
      %v1390 = vpow.pop %v1389
      %v1391 = vmul.f32 %v1382, 1.442695
      %v1392 = vpow.pop %v1391
      %v1393 = vmul.f32 %v1383, 1.442695
      %v1394 = vpow.pop %v1393
      %v1395 = vmul.f32 %v1384, 1.442695
      %v1396 = vpow.pop %v1395
      %v1397 = vmul.f32 %v1385, 1.442695
      %v1398 = vpow.pop %v1397
      %v1399 = vmul.f32 %v1386, 1.442695
      %v1400 = vpow.pop %v1399
      %v1401 = vadd.f32 %v1388, 1.0
      %v1402 = vadd.f32 %v1390, 1.0
      %v1403 = vadd.f32 %v1392, 1.0
      %v1404 = vadd.f32 %v1394, 1.0
      %v1405 = vadd.f32 %v1396, 1.0
      %v1406 = vadd.f32 %v1398, 1.0
      %v1407 = vadd.f32 %v1400, 1.0
      %v1408 = vrcp.pop %v1401
      %v1409 = vmul.f32 %v1401, %v1408
      %v1410 = vsub.f32 1.0, %v1409
      %v1411 = vmul.f32 %v1408, %v1410
      %v1412 = vadd.f32 %v1408, %v1411
      %vm1413 = vweird.f32 %v1401
      %vm1414 = vweird.f32 %v1408
      %vm1415 = vmor %vm1413, %vm1414
      %v1416 = vsel %vm1415, %v1408, %v1412
      %v1417 = vand.u32 2147483647, %v1401
      %vm1418 = vcmp.eq.f32.partialorder %v1417, 8.507059e+37
      %v1419 = vand.u32 %v1401, 2147483648
      %v1420 = vor.u32 1.1754944e-38, %v1419
      %v1421 = vsel %vm1418, %v1420, %v1416
      %v1422 = vmul.f32 1.0, %v1421
      %v1423 = vrcp.pop %v1402
      %v1424 = vmul.f32 %v1402, %v1423
      %v1425 = vsub.f32 1.0, %v1424
      %v1426 = vmul.f32 %v1423, %v1425
      %v1427 = vadd.f32 %v1423, %v1426
      %vm1428 = vweird.f32 %v1402
      %vm1429 = vweird.f32 %v1423
      %vm1430 = vmor %vm1428, %vm1429
      %v1431 = vsel %vm1430, %v1423, %v1427
      %v1432 = vand.u32 2147483647, %v1402
      %vm1433 = vcmp.eq.f32.partialorder %v1432, 8.507059e+37
      %v1434 = vand.u32 %v1402, 2147483648
      %v1435 = vor.u32 1.1754944e-38, %v1434
      %v1436 = vsel %vm1433, %v1435, %v1431
      %v1437 = vmul.f32 1.0, %v1436
      %v1438 = vrcp.pop %v1403
      %v1439 = vmul.f32 %v1403, %v1438
      %v1440 = vsub.f32 1.0, %v1439
      %v1441 = vmul.f32 %v1438, %v1440
      %v1442 = vadd.f32 %v1438, %v1441
      %vm1443 = vweird.f32 %v1403
      %vm1444 = vweird.f32 %v1438
      %vm1445 = vmor %vm1443, %vm1444
      %v1446 = vsel %vm1445, %v1438, %v1442
      %v1447 = vand.u32 2147483647, %v1403
      %vm1448 = vcmp.eq.f32.partialorder %v1447, 8.507059e+37
      %v1449 = vand.u32 %v1403, 2147483648
      %v1450 = vor.u32 1.1754944e-38, %v1449
      %v1451 = vsel %vm1448, %v1450, %v1446
      %v1452 = vmul.f32 1.0, %v1451
      %v1453 = vrcp.pop %v1404
      %v1454 = vmul.f32 %v1404, %v1453
      %v1455 = vsub.f32 1.0, %v1454
      %v1456 = vmul.f32 %v1453, %v1455
      %v1457 = vadd.f32 %v1453, %v1456
      %vm1458 = vweird.f32 %v1404
      %vm1459 = vweird.f32 %v1453
      %vm1460 = vmor %vm1458, %vm1459
      %v1461 = vsel %vm1460, %v1453, %v1457
      %v1462 = vand.u32 2147483647, %v1404
      %vm1463 = vcmp.eq.f32.partialorder %v1462, 8.507059e+37
      %v1464 = vand.u32 %v1404, 2147483648
      %v1465 = vor.u32 1.1754944e-38, %v1464
      %v1466 = vsel %vm1463, %v1465, %v1461
      %v1467 = vmul.f32 1.0, %v1466
      %v1468 = vrcp.pop %v1405
      %v1469 = vmul.f32 %v1405, %v1468
      %v1470 = vsub.f32 1.0, %v1469
      %v1471 = vmul.f32 %v1468, %v1470
      %v1472 = vadd.f32 %v1468, %v1471
      %vm1473 = vweird.f32 %v1405
      %vm1474 = vweird.f32 %v1468
      %vm1475 = vmor %vm1473, %vm1474
      %v1476 = vsel %vm1475, %v1468, %v1472
      %v1477 = vand.u32 2147483647, %v1405
      %vm1478 = vcmp.eq.f32.partialorder %v1477, 8.507059e+37
      %v1479 = vand.u32 %v1405, 2147483648
      %v1480 = vor.u32 1.1754944e-38, %v1479
      %v1481 = vsel %vm1478, %v1480, %v1476
      %v1482 = vmul.f32 1.0, %v1481
      %v1483 = vrcp.pop %v1406
      %v1484 = vmul.f32 %v1406, %v1483
      %v1485 = vsub.f32 1.0, %v1484
      %v1486 = vmul.f32 %v1483, %v1485
      %v1487 = vadd.f32 %v1483, %v1486
      %vm1488 = vweird.f32 %v1406
      %vm1489 = vweird.f32 %v1483
      %vm1490 = vmor %vm1488, %vm1489
      %v1491 = vsel %vm1490, %v1483, %v1487
      %v1492 = vand.u32 2147483647, %v1406
      %vm1493 = vcmp.eq.f32.partialorder %v1492, 8.507059e+37
      %v1494 = vand.u32 %v1406, 2147483648
      %v1495 = vor.u32 1.1754944e-38, %v1494
      %v1496 = vsel %vm1493, %v1495, %v1491
      %v1497 = vmul.f32 1.0, %v1496
      %v1498 = vrcp.pop %v1407
      %v1499 = vmul.f32 %v1407, %v1498
      %v1500 = vsub.f32 1.0, %v1499
      %v1501 = vmul.f32 %v1498, %v1500
      %v1502 = vadd.f32 %v1498, %v1501
      %vm1503 = vweird.f32 %v1407
      %vm1504 = vweird.f32 %v1498
      %vm1505 = vmor %vm1503, %vm1504
      %v1506 = vsel %vm1505, %v1498, %v1502
      %v1507 = vand.u32 2147483647, %v1407
      %vm1508 = vcmp.eq.f32.partialorder %v1507, 8.507059e+37
      %v1509 = vand.u32 %v1407, 2147483648
      %v1510 = vor.u32 1.1754944e-38, %v1509
      %v1511 = vsel %vm1508, %v1510, %v1506
      %v1512 = vmul.f32 1.0, %v1511
      %v1513 = vmul.f32 %v1360, %v1422
      %v1514 = vmul.f32 %v1363, %v1437
      %v1515 = vmul.f32 %v1366, %v1452
      %v1516 = vmul.f32 %v1369, %v1467
      %v1517 = vmul.f32 %v1372, %v1482
      %v1518 = vmul.f32 %v1375, %v1497
      %v1519 = vmul.f32 %v1378, %v1512
      %s1520 = scalar_lea.vmem [#allocation9], 640
      %v1521 = vld [vmem:[%s1520] sm:$0xff]
      %v1522 = vld [vmem:[%s1520 + $0x8] sm:$0xff]
      %v1523 = vld [vmem:[%s1520 + $0x10] sm:$0xff]
      %v1524 = vld [vmem:[%s1520 + $0x18] sm:$0xff]
      %v1525 = vld [vmem:[%s1520 + $0x20] sm:$0xff]
      %v1526 = vld [vmem:[%s1520 + $0x28] sm:$0xff]
      %v1527 = vld [vmem:[%s1520 + $0x30] sm:$0xff]
      %v1528 = vld [vmem:[%s1520 + $0x38] sm:$0xff]
      %v1529 = vld [vmem:[%s1520 + $0x40] sm:$0xff]
      %v1530 = vld [vmem:[%s1520 + $0x48] sm:$0xff]
      %v1531 = vld [vmem:[%s1520 + $0x50] sm:$0xff]
      %v1532 = vld [vmem:[%s1520 + $0x58] sm:$0xff]
      %v1533 = vld [vmem:[%s1520 + $0x60] sm:$0xff]
      %v1534 = vld [vmem:[%s1520 + $0x68] sm:$0xff]
      %v1535 = vld [vmem:[%s1520 + $0x70] sm:$0xff]
      %v1536 = vld [vmem:[%s1520 + $0x78] sm:$0xff]
      %s1537 = scalar_lea.vmem [#allocation11], 5
      %v1538 = vld [vmem:[%s1537] sm:$0x1]
      %v1540 = vperm.slane %v1538, 0
      %1542 = vmatpush.msra.mxu0 %v1536
      %1543 = vmatpush.msra.mxu0 %v1535
      %1544 = vmatpush.msra.mxu0 %v1534
      %1545 = vmatpush.msra.mxu0 %v1533
      %1546 = vmatpush.msra.mxu0 %v1532
      %1547 = vmatpush.msra.mxu0 %v1531
      %1548 = vmatpush.msra.mxu0 %v1530
      %1549 = vmatpush.msra.mxu0 %v1529
      %1550 = vmatpush.msra.mxu0 %v1528
      %1551 = vmatpush.msra.mxu0 %v1527
      %1552 = vmatpush.msra.mxu0 %v1526
      %1553 = vmatpush.msra.mxu0 %v1525
      %1554 = vmatpush.msra.mxu0 %v1524
      %1555 = vmatpush.msra.mxu0 %v1523
      %1556 = vmatpush.msra.mxu0 %v1522
      %1557 = vmatpush.msra.mxu0 %v1521
      %1558 = vmatmul.f32.gmra.mxu0 %v1513
      %v1559 = vpop.f32.mrf.mxu0
      %v1560 = vadd.f32 %v1540, %v1559
      %1561 = vmatmul.f32.gmra.mxu0 %v1514
      %v1562 = vpop.f32.mrf.mxu0
      %v1563 = vadd.f32 %v1540, %v1562
      %1564 = vmatmul.f32.gmra.mxu0 %v1515
      %v1565 = vpop.f32.mrf.mxu0
      %v1566 = vadd.f32 %v1540, %v1565
      %1567 = vmatmul.f32.gmra.mxu0 %v1516
      %v1568 = vpop.f32.mrf.mxu0
      %v1569 = vadd.f32 %v1540, %v1568
      %1570 = vmatmul.f32.gmra.mxu0 %v1517
      %v1571 = vpop.f32.mrf.mxu0
      %v1572 = vadd.f32 %v1540, %v1571
      %1573 = vmatmul.f32.gmra.mxu0 %v1518
      %v1574 = vpop.f32.mrf.mxu0
      %v1575 = vadd.f32 %v1540, %v1574
      %1576 = vmatmul.f32.gmra.mxu0 %v1519
      %v1577 = vpop.f32.mrf.mxu0
      %v1578 = vadd.f32 %v1540, %v1577
      %1579 = vdwg.mxu0
      %v1580 = vxor.u32 %v1560, 2147483648
      %v1581 = vxor.u32 %v1563, 2147483648
      %v1582 = vxor.u32 %v1566, 2147483648
      %v1583 = vxor.u32 %v1569, 2147483648
      %v1584 = vxor.u32 %v1572, 2147483648
      %v1585 = vxor.u32 %v1575, 2147483648
      %v1586 = vxor.u32 %v1578, 2147483648
      %v1587 = vmul.f32 %v1580, 1.442695
      %v1588 = vpow.pop %v1587
      %v1589 = vmul.f32 %v1581, 1.442695
      %v1590 = vpow.pop %v1589
      %v1591 = vmul.f32 %v1582, 1.442695
      %v1592 = vpow.pop %v1591
      %v1593 = vmul.f32 %v1583, 1.442695
      %v1594 = vpow.pop %v1593
      %v1595 = vmul.f32 %v1584, 1.442695
      %v1596 = vpow.pop %v1595
      %v1597 = vmul.f32 %v1585, 1.442695
      %v1598 = vpow.pop %v1597
      %v1599 = vmul.f32 %v1586, 1.442695
      %v1600 = vpow.pop %v1599
      %v1601 = vadd.f32 %v1588, 1.0
      %v1602 = vadd.f32 %v1590, 1.0
      %v1603 = vadd.f32 %v1592, 1.0
      %v1604 = vadd.f32 %v1594, 1.0
      %v1605 = vadd.f32 %v1596, 1.0
      %v1606 = vadd.f32 %v1598, 1.0
      %v1607 = vadd.f32 %v1600, 1.0
      %v1608 = vrcp.pop %v1601
      %v1609 = vmul.f32 %v1601, %v1608
      %v1610 = vsub.f32 1.0, %v1609
      %v1611 = vmul.f32 %v1608, %v1610
      %v1612 = vadd.f32 %v1608, %v1611
      %vm1613 = vweird.f32 %v1601
      %vm1614 = vweird.f32 %v1608
      %vm1615 = vmor %vm1613, %vm1614
      %v1616 = vsel %vm1615, %v1608, %v1612
      %v1617 = vand.u32 2147483647, %v1601
      %vm1618 = vcmp.eq.f32.partialorder %v1617, 8.507059e+37
      %v1619 = vand.u32 %v1601, 2147483648
      %v1620 = vor.u32 1.1754944e-38, %v1619
      %v1621 = vsel %vm1618, %v1620, %v1616
      %v1622 = vmul.f32 1.0, %v1621
      %v1623 = vrcp.pop %v1602
      %v1624 = vmul.f32 %v1602, %v1623
      %v1625 = vsub.f32 1.0, %v1624
      %v1626 = vmul.f32 %v1623, %v1625
      %v1627 = vadd.f32 %v1623, %v1626
      %vm1628 = vweird.f32 %v1602
      %vm1629 = vweird.f32 %v1623
      %vm1630 = vmor %vm1628, %vm1629
      %v1631 = vsel %vm1630, %v1623, %v1627
      %v1632 = vand.u32 2147483647, %v1602
      %vm1633 = vcmp.eq.f32.partialorder %v1632, 8.507059e+37
      %v1634 = vand.u32 %v1602, 2147483648
      %v1635 = vor.u32 1.1754944e-38, %v1634
      %v1636 = vsel %vm1633, %v1635, %v1631
      %v1637 = vmul.f32 1.0, %v1636
      %v1638 = vrcp.pop %v1603
      %v1639 = vmul.f32 %v1603, %v1638
      %v1640 = vsub.f32 1.0, %v1639
      %v1641 = vmul.f32 %v1638, %v1640
      %v1642 = vadd.f32 %v1638, %v1641
      %vm1643 = vweird.f32 %v1603
      %vm1644 = vweird.f32 %v1638
      %vm1645 = vmor %vm1643, %vm1644
      %v1646 = vsel %vm1645, %v1638, %v1642
      %v1647 = vand.u32 2147483647, %v1603
      %vm1648 = vcmp.eq.f32.partialorder %v1647, 8.507059e+37
      %v1649 = vand.u32 %v1603, 2147483648
      %v1650 = vor.u32 1.1754944e-38, %v1649
      %v1651 = vsel %vm1648, %v1650, %v1646
      %v1652 = vmul.f32 1.0, %v1651
      %v1653 = vrcp.pop %v1604
      %v1654 = vmul.f32 %v1604, %v1653
      %v1655 = vsub.f32 1.0, %v1654
      %v1656 = vmul.f32 %v1653, %v1655
      %v1657 = vadd.f32 %v1653, %v1656
      %vm1658 = vweird.f32 %v1604
      %vm1659 = vweird.f32 %v1653
      %vm1660 = vmor %vm1658, %vm1659
      %v1661 = vsel %vm1660, %v1653, %v1657
      %v1662 = vand.u32 2147483647, %v1604
      %vm1663 = vcmp.eq.f32.partialorder %v1662, 8.507059e+37
      %v1664 = vand.u32 %v1604, 2147483648
      %v1665 = vor.u32 1.1754944e-38, %v1664
      %v1666 = vsel %vm1663, %v1665, %v1661
      %v1667 = vmul.f32 1.0, %v1666
      %v1668 = vrcp.pop %v1605
      %v1669 = vmul.f32 %v1605, %v1668
      %v1670 = vsub.f32 1.0, %v1669
      %v1671 = vmul.f32 %v1668, %v1670
      %v1672 = vadd.f32 %v1668, %v1671
      %vm1673 = vweird.f32 %v1605
      %vm1674 = vweird.f32 %v1668
      %vm1675 = vmor %vm1673, %vm1674
      %v1676 = vsel %vm1675, %v1668, %v1672
      %v1677 = vand.u32 2147483647, %v1605
      %vm1678 = vcmp.eq.f32.partialorder %v1677, 8.507059e+37
      %v1679 = vand.u32 %v1605, 2147483648
      %v1680 = vor.u32 1.1754944e-38, %v1679
      %v1681 = vsel %vm1678, %v1680, %v1676
      %v1682 = vmul.f32 1.0, %v1681
      %v1683 = vrcp.pop %v1606
      %v1684 = vmul.f32 %v1606, %v1683
      %v1685 = vsub.f32 1.0, %v1684
      %v1686 = vmul.f32 %v1683, %v1685
      %v1687 = vadd.f32 %v1683, %v1686
      %vm1688 = vweird.f32 %v1606
      %vm1689 = vweird.f32 %v1683
      %vm1690 = vmor %vm1688, %vm1689
      %v1691 = vsel %vm1690, %v1683, %v1687
      %v1692 = vand.u32 2147483647, %v1606
      %vm1693 = vcmp.eq.f32.partialorder %v1692, 8.507059e+37
      %v1694 = vand.u32 %v1606, 2147483648
      %v1695 = vor.u32 1.1754944e-38, %v1694
      %v1696 = vsel %vm1693, %v1695, %v1691
      %v1697 = vmul.f32 1.0, %v1696
      %v1698 = vrcp.pop %v1607
      %v1699 = vmul.f32 %v1607, %v1698
      %v1700 = vsub.f32 1.0, %v1699
      %v1701 = vmul.f32 %v1698, %v1700
      %v1702 = vadd.f32 %v1698, %v1701
      %vm1703 = vweird.f32 %v1607
      %vm1704 = vweird.f32 %v1698
      %vm1705 = vmor %vm1703, %vm1704
      %v1706 = vsel %vm1705, %v1698, %v1702
      %v1707 = vand.u32 2147483647, %v1607
      %vm1708 = vcmp.eq.f32.partialorder %v1707, 8.507059e+37
      %v1709 = vand.u32 %v1607, 2147483648
      %v1710 = vor.u32 1.1754944e-38, %v1709
      %v1711 = vsel %vm1708, %v1710, %v1706
      %v1712 = vmul.f32 1.0, %v1711
      %v1713 = vmul.f32 %v1560, %v1622
      %v1714 = vmul.f32 %v1563, %v1637
      %v1715 = vmul.f32 %v1566, %v1652
      %v1716 = vmul.f32 %v1569, %v1667
      %v1717 = vmul.f32 %v1572, %v1682
      %v1718 = vmul.f32 %v1575, %v1697
      %v1719 = vmul.f32 %v1578, %v1712
      %v1720 = vld [vmem:[#allocation12] sm:$0xff]
      %v1721 = vld [vmem:[#allocation12 + $0x8] sm:$0xff]
      %v1722 = vld [vmem:[#allocation12 + $0x10] sm:$0xff]
      %v1723 = vld [vmem:[#allocation12 + $0x18] sm:$0xff]
      %v1724 = vld [vmem:[#allocation12 + $0x20] sm:$0xff]
      %v1725 = vld [vmem:[#allocation12 + $0x28] sm:$0xff]
      %v1726 = vld [vmem:[#allocation12 + $0x30] sm:$0xff]
      %v1727 = vld [vmem:[#allocation12 + $0x38] sm:$0xff]
      %v1728 = vld [vmem:[#allocation12 + $0x40] sm:$0xff]
      %v1729 = vld [vmem:[#allocation12 + $0x48] sm:$0xff]
      %v1730 = vld [vmem:[#allocation12 + $0x50] sm:$0xff]
      %v1731 = vld [vmem:[#allocation12 + $0x58] sm:$0xff]
      %v1732 = vld [vmem:[#allocation12 + $0x60] sm:$0xff]
      %v1733 = vld [vmem:[#allocation12 + $0x68] sm:$0xff]
      %v1734 = vld [vmem:[#allocation12 + $0x70] sm:$0xff]
      %v1735 = vld [vmem:[#allocation12 + $0x78] sm:$0xff]
      %v1736 = vld [vmem:[#allocation12 + $0x80] sm:$0xff]
      %v1737 = vld [vmem:[#allocation12 + $0x88] sm:$0xff]
      %v1738 = vld [vmem:[#allocation12 + $0x90] sm:$0xff]
      %v1739 = vld [vmem:[#allocation12 + $0x98] sm:$0xff]
      %v1740 = vld [vmem:[#allocation12 + $0xa0] sm:$0xff]
      %v1741 = vld [vmem:[#allocation12 + $0xa8] sm:$0xff]
      %v1742 = vld [vmem:[#allocation12 + $0xb0] sm:$0xff]
      %v1743 = vld [vmem:[#allocation12 + $0xb8] sm:$0xff]
      %v1744 = vld [vmem:[#allocation12 + $0xc0] sm:$0xff]
      %v1745 = vld [vmem:[#allocation12 + $0xc8] sm:$0xff]
      %v1746 = vld [vmem:[#allocation12 + $0xd0] sm:$0xff]
      %v1747 = vld [vmem:[#allocation12 + $0xd8] sm:$0xff]
      %v1748 = vld [vmem:[#allocation12 + $0xe0] sm:$0xff]
      %v1749 = vld [vmem:[#allocation12 + $0xe8] sm:$0xff]
      %v1750 = vld [vmem:[#allocation12 + $0xf0] sm:$0xff]
      %v1751 = vld [vmem:[#allocation12 + $0xf8] sm:$0xff]
      %v1752 = vld [vmem:[#allocation12 + $0x100] sm:$0xff]
      %v1753 = vld [vmem:[#allocation12 + $0x108] sm:$0xff]
      %v1754 = vld [vmem:[#allocation12 + $0x110] sm:$0xff]
      %v1755 = vld [vmem:[#allocation12 + $0x118] sm:$0xff]
      %v1756 = vld [vmem:[#allocation12 + $0x120] sm:$0xff]
      %v1757 = vld [vmem:[#allocation12 + $0x128] sm:$0xff]
      %v1758 = vld [vmem:[#allocation12 + $0x130] sm:$0xff]
      %v1759 = vld [vmem:[#allocation12 + $0x138] sm:$0xff]
      %v1760 = vld [vmem:[#allocation12 + $0x140] sm:$0xff]
      %v1761 = vld [vmem:[#allocation12 + $0x148] sm:$0xff]
      %v1762 = vld [vmem:[#allocation12 + $0x150] sm:$0xff]
      %v1763 = vld [vmem:[#allocation12 + $0x158] sm:$0xff]
      %v1764 = vld [vmem:[#allocation12 + $0x160] sm:$0xff]
      %v1765 = vld [vmem:[#allocation12 + $0x168] sm:$0xff]
      %v1766 = vld [vmem:[#allocation12 + $0x170] sm:$0xff]
      %v1767 = vld [vmem:[#allocation12 + $0x178] sm:$0xff]
      %v1768 = vld [vmem:[#allocation12 + $0x180] sm:$0xff]
      %v1769 = vld [vmem:[#allocation12 + $0x188] sm:$0xff]
      %v1770 = vld [vmem:[#allocation12 + $0x190] sm:$0xff]
      %v1771 = vld [vmem:[#allocation12 + $0x198] sm:$0xff]
      %v1772 = vld [vmem:[#allocation12 + $0x1a0] sm:$0xff]
      %v1773 = vld [vmem:[#allocation12 + $0x1a8] sm:$0xff]
      %v1774 = vld [vmem:[#allocation12 + $0x1b0] sm:$0xff]
      %v1775 = vld [vmem:[#allocation12 + $0x1b8] sm:$0xff]
      %v1776 = vld [vmem:[#allocation12 + $0x1c0] sm:$0xff]
      %v1777 = vld [vmem:[#allocation12 + $0x1c8] sm:$0xff]
      %v1778 = vld [vmem:[#allocation12 + $0x1d0] sm:$0xff]
      %v1779 = vld [vmem:[#allocation12 + $0x1d8] sm:$0xff]
      %v1780 = vld [vmem:[#allocation12 + $0x1e0] sm:$0xff]
      %v1781 = vld [vmem:[#allocation12 + $0x1e8] sm:$0xff]
      %v1782 = vld [vmem:[#allocation12 + $0x1f0] sm:$0xff]
      %v1783 = vld [vmem:[#allocation12 + $0x1f8] sm:$0xff]
      %1784 = vmatpush.msra.mxu0 %v1750
      %1785 = vmatpush.msra.mxu0 %v1748
      %1786 = vmatpush.msra.mxu0 %v1746
      %1787 = vmatpush.msra.mxu0 %v1744
      %1788 = vmatpush.msra.mxu0 %v1742
      %1789 = vmatpush.msra.mxu0 %v1740
      %1790 = vmatpush.msra.mxu0 %v1738
      %1791 = vmatpush.msra.mxu0 %v1736
      %1792 = vmatpush.msra.mxu0 %v1734
      %1793 = vmatpush.msra.mxu0 %v1732
      %1794 = vmatpush.msra.mxu0 %v1730
      %1795 = vmatpush.msra.mxu0 %v1728
      %1796 = vmatpush.msra.mxu0 %v1726
      %1797 = vmatpush.msra.mxu0 %v1724
      %1798 = vmatpush.msra.mxu0 %v1722
      %1799 = vmatpush.msra.mxu0 %v1720
      %1800 = vmatmul.f32.gmra.mxu0 %v1113
      %v1801 = vpop.f32.mrf.mxu0
      %v1802 = vadd.f32 0.0, %v1801
      %1803 = vmatmul.f32.gmra.mxu0 %v1114
      %v1804 = vpop.f32.mrf.mxu0
      %v1805 = vadd.f32 0.0, %v1804
      %1806 = vmatmul.f32.gmra.mxu0 %v1115
      %v1807 = vpop.f32.mrf.mxu0
      %v1808 = vadd.f32 0.0, %v1807
      %1809 = vmatmul.f32.gmra.mxu0 %v1116
      %v1810 = vpop.f32.mrf.mxu0
      %v1811 = vadd.f32 0.0, %v1810
      %1812 = vmatmul.f32.gmra.mxu0 %v1117
      %v1813 = vpop.f32.mrf.mxu0
      %v1814 = vadd.f32 0.0, %v1813
      %1815 = vmatmul.f32.gmra.mxu0 %v1118
      %v1816 = vpop.f32.mrf.mxu0
      %v1817 = vadd.f32 0.0, %v1816
      %1818 = vmatmul.f32.gmra.mxu0 %v1119
      %v1819 = vpop.f32.mrf.mxu0
      %v1820 = vadd.f32 0.0, %v1819
      %1821 = vdwg.mxu0
      %1822 = vmatpush.msra.mxu0 %v1782
      %1823 = vmatpush.msra.mxu0 %v1780
      %1824 = vmatpush.msra.mxu0 %v1778
      %1825 = vmatpush.msra.mxu0 %v1776
      %1826 = vmatpush.msra.mxu0 %v1774
      %1827 = vmatpush.msra.mxu0 %v1772
      %1828 = vmatpush.msra.mxu0 %v1770
      %1829 = vmatpush.msra.mxu0 %v1768
      %1830 = vmatpush.msra.mxu0 %v1766
      %1831 = vmatpush.msra.mxu0 %v1764
      %1832 = vmatpush.msra.mxu0 %v1762
      %1833 = vmatpush.msra.mxu0 %v1760
      %1834 = vmatpush.msra.mxu0 %v1758
      %1835 = vmatpush.msra.mxu0 %v1756
      %1836 = vmatpush.msra.mxu0 %v1754
      %1837 = vmatpush.msra.mxu0 %v1752
      %1838 = vmatmul.f32.gmra.mxu0 %v1713
      %v1839 = vpop.f32.mrf.mxu0
      %v1840 = vadd.f32 %v1802, %v1839
      %1841 = vmatmul.f32.gmra.mxu0 %v1714
      %v1842 = vpop.f32.mrf.mxu0
      %v1843 = vadd.f32 %v1805, %v1842
      %1844 = vmatmul.f32.gmra.mxu0 %v1715
      %v1845 = vpop.f32.mrf.mxu0
      %v1846 = vadd.f32 %v1808, %v1845
      %1847 = vmatmul.f32.gmra.mxu0 %v1716
      %v1848 = vpop.f32.mrf.mxu0
      %v1849 = vadd.f32 %v1811, %v1848
      %1850 = vmatmul.f32.gmra.mxu0 %v1717
      %v1851 = vpop.f32.mrf.mxu0
      %v1852 = vadd.f32 %v1814, %v1851
      %1853 = vmatmul.f32.gmra.mxu0 %v1718
      %v1854 = vpop.f32.mrf.mxu0
      %v1855 = vadd.f32 %v1817, %v1854
      %1856 = vmatmul.f32.gmra.mxu0 %v1719
      %v1857 = vpop.f32.mrf.mxu0
      %v1858 = vadd.f32 %v1820, %v1857
      %1859 = vdwg.mxu0
      %1860 = vmatpush.msra.mxu0 %v1751
      %1861 = vmatpush.msra.mxu0 %v1749
      %1862 = vmatpush.msra.mxu0 %v1747
      %1863 = vmatpush.msra.mxu0 %v1745
      %1864 = vmatpush.msra.mxu0 %v1743
      %1865 = vmatpush.msra.mxu0 %v1741
      %1866 = vmatpush.msra.mxu0 %v1739
      %1867 = vmatpush.msra.mxu0 %v1737
      %1868 = vmatpush.msra.mxu0 %v1735
      %1869 = vmatpush.msra.mxu0 %v1733
      %1870 = vmatpush.msra.mxu0 %v1731
      %1871 = vmatpush.msra.mxu0 %v1729
      %1872 = vmatpush.msra.mxu0 %v1727
      %1873 = vmatpush.msra.mxu0 %v1725
      %1874 = vmatpush.msra.mxu0 %v1723
      %1875 = vmatpush.msra.mxu0 %v1721
      %1876 = vmatmul.f32.gmra.mxu0 %v1113
      %v1877 = vpop.f32.mrf.mxu0
      %v1878 = vadd.f32 0.0, %v1877
      %1879 = vmatmul.f32.gmra.mxu0 %v1114
      %v1880 = vpop.f32.mrf.mxu0
      %v1881 = vadd.f32 0.0, %v1880
      %1882 = vmatmul.f32.gmra.mxu0 %v1115
      %v1883 = vpop.f32.mrf.mxu0
      %v1884 = vadd.f32 0.0, %v1883
      %1885 = vmatmul.f32.gmra.mxu0 %v1116
      %v1886 = vpop.f32.mrf.mxu0
      %v1887 = vadd.f32 0.0, %v1886
      %1888 = vmatmul.f32.gmra.mxu0 %v1117
      %v1889 = vpop.f32.mrf.mxu0
      %v1890 = vadd.f32 0.0, %v1889
      %1891 = vmatmul.f32.gmra.mxu0 %v1118
      %v1892 = vpop.f32.mrf.mxu0
      %v1893 = vadd.f32 0.0, %v1892
      %1894 = vmatmul.f32.gmra.mxu0 %v1119
      %v1895 = vpop.f32.mrf.mxu0
      %v1896 = vadd.f32 0.0, %v1895
      %1897 = vdwg.mxu0
      %1898 = vmatpush.msra.mxu0 %v1783
      %1899 = vmatpush.msra.mxu0 %v1781
      %1900 = vmatpush.msra.mxu0 %v1779
      %1901 = vmatpush.msra.mxu0 %v1777
      %1902 = vmatpush.msra.mxu0 %v1775
      %1903 = vmatpush.msra.mxu0 %v1773
      %1904 = vmatpush.msra.mxu0 %v1771
      %1905 = vmatpush.msra.mxu0 %v1769
      %1906 = vmatpush.msra.mxu0 %v1767
      %1907 = vmatpush.msra.mxu0 %v1765
      %1908 = vmatpush.msra.mxu0 %v1763
      %1909 = vmatpush.msra.mxu0 %v1761
      %1910 = vmatpush.msra.mxu0 %v1759
      %1911 = vmatpush.msra.mxu0 %v1757
      %1912 = vmatpush.msra.mxu0 %v1755
      %1913 = vmatpush.msra.mxu0 %v1753
      %1914 = vmatmul.f32.gmra.mxu0 %v1713
      %v1915 = vpop.f32.mrf.mxu0
      %v1916 = vadd.f32 %v1878, %v1915
      %1917 = vmatmul.f32.gmra.mxu0 %v1714
      %v1918 = vpop.f32.mrf.mxu0
      %v1919 = vadd.f32 %v1881, %v1918
      %1920 = vmatmul.f32.gmra.mxu0 %v1715
      %v1921 = vpop.f32.mrf.mxu0
      %v1922 = vadd.f32 %v1884, %v1921
      %1923 = vmatmul.f32.gmra.mxu0 %v1716
      %v1924 = vpop.f32.mrf.mxu0
      %v1925 = vadd.f32 %v1887, %v1924
      %1926 = vmatmul.f32.gmra.mxu0 %v1717
      %v1927 = vpop.f32.mrf.mxu0
      %v1928 = vadd.f32 %v1890, %v1927
      %1929 = vmatmul.f32.gmra.mxu0 %v1718
      %v1930 = vpop.f32.mrf.mxu0
      %v1931 = vadd.f32 %v1893, %v1930
      %1932 = vmatmul.f32.gmra.mxu0 %v1719
      %v1933 = vpop.f32.mrf.mxu0
      %v1934 = vadd.f32 %v1896, %v1933
      %1935 = vdwg.mxu0
      %1936 = vst [vmem:[#allocation14] sm:$0xff] %v1840
      %1937 = vst [vmem:[#allocation14 + $0x8] sm:$0xff] %v1843
      %1938 = vst [vmem:[#allocation14 + $0x10] sm:$0xff] %v1846
      %1939 = vst [vmem:[#allocation14 + $0x18] sm:$0xff] %v1849
      %1940 = vst [vmem:[#allocation14 + $0x20] sm:$0xff] %v1852
      %1941 = vst [vmem:[#allocation14 + $0x28] sm:$0xff] %v1855
      %1942 = vst [vmem:[#allocation14 + $0x30] sm:$0xff] %v1858
      %1943 = vst [vmem:[#allocation15] sm:$0xff] %v1916
      %1944 = vst [vmem:[#allocation15 + $0x8] sm:$0xff] %v1919
      %1945 = vst [vmem:[#allocation15 + $0x10] sm:$0xff] %v1922
      %1946 = vst [vmem:[#allocation15 + $0x18] sm:$0xff] %v1925
      %1947 = vst [vmem:[#allocation15 + $0x20] sm:$0xff] %v1928
      %1948 = vst [vmem:[#allocation15 + $0x28] sm:$0xff] %v1931
      %1949 = vst [vmem:[#allocation15 + $0x30] sm:$0xff] %v1934
    $region57: #{tpu_custom_call.1} parent=1 // pred_fallthru
      _
    // Predicated region
    $region58: #{tpu_custom_call.1} parent=1 // pred_check
      _
    $region59: #{tpu_custom_call.1} parent=1 // pred_check_branch
      %1951 = sbr.rel (0) target = $region61
    $region60: #{tpu_custom_call.1} parent=1 // pred_region
      %1953 = vsyncadd [#allocation5], 0
      %s1954 = sshll.u32 [#allocation14], 4
      %s1955 = int_to_ptr.vmem [resolvable:$true] %s1954
      %s1956 = sshll.u32 %s6, 4
      %s1957 = int_to_ptr.hbm [resolvable:$true] %s1956
      %1962 = dma.vmem_to_hbm [thread:$0]  %s1955, 896, %s1957, [#allocation5], 128, 128, 8
    $region61: #{tpu_custom_call.1} parent=1 // pred_fallthru
      _
    // Predicated region
    $region62: #{tpu_custom_call.1} parent=1 // pred_check
      _
    $region63: #{tpu_custom_call.1} parent=1 // pred_check_branch
      %1964 = sbr.rel (0) target = $region65
    $region64: #{tpu_custom_call.1} parent=1 // pred_region
      %1966 = vsyncadd [#allocation16], 0
      %s1967 = sshll.u32 [#allocation15], 4
      %s1968 = int_to_ptr.vmem [resolvable:$true] %s1967
      %s1969 = sshll.u32 %s7, 4
      %s1970 = int_to_ptr.hbm [resolvable:$true] %s1969
      %1975 = dma.vmem_to_hbm [thread:$0]  %s1968, 896, %s1970, [#allocation16], 128, 128, 8
    $region65: #{tpu_custom_call.1} parent=1 // pred_fallthru
      _
    // Predicated region
    $region66: #{tpu_custom_call.1} parent=1 // pred_check
      _
    $region67: #{tpu_custom_call.1} parent=1 // pred_check_branch
      %1977 = sbr.rel (0) target = $region69
    $region68: #{tpu_custom_call.1} parent=1 // pred_region
      %1979 = dma.done [#allocation5], 896
    $region69: #{tpu_custom_call.1} parent=1 // pred_fallthru
      _
    // Predicated region
    $region70: #{tpu_custom_call.1} parent=1 // pred_check
      _
    $region71: #{tpu_custom_call.1} parent=1 // pred_check_branch
      %1981 = sbr.rel (0) target = $region73
    $region72: #{tpu_custom_call.1} parent=1 // pred_region
      %1983 = dma.done [#allocation16], 896
    $region73: #{tpu_custom_call.1} parent=1 // pred_fallthru
      _
    %1984 = vsyncpa [#allocation4], 1
    %1985 = vsyncpa [#allocation7], 1
    %1986 = vsyncpa [#allocation10], 1
    %1987 = vsyncpa [#allocation13], 1
    %1988 = vsyncpa [#allocation5], 1
    %1989 = vsyncpa [#allocation16], 1

</llo_original>
